<compile_context>
chip_gen: v7x
topology: tpu7x:2x2x1
jax: 0.10.0
libtpu: 0.0.40
codegen_flags: <defaults>
</compile_context>

<pallas_src>
import functools

import jax
import jax.numpy as jnp
import numpy as np
from jax import lax
from jax.experimental import pallas as pl
from jax.experimental.pallas import tpu as pltpu

# ----- small, module-consistent sizes -----
B, S, D = 2, 8, 32          # batch, seq, d_model
BS = B * S                  # rows per kernel invocation (both batches stacked)
H = 4                       # heads
DK = D // H                 # d_k
DFF = 64                    # feed-forward hidden
EPS = 1e-6
NEG = -1e9

# ----- weight-pack row offsets (all static); pack is (WROWS, 4*D)=(160,128) bf16
R_ATT1 = 0          # rows [ 0, 32): [Wq1*s | Wk1 | Wv1 | Wo1]
R_ATT2 = D          # rows [32, 64): [Wq2*s | Wk2 | Wv2 | Wo2]
R_W1 = 2 * D        # rows [64, 96): [w1 (32,64) | 0]
R_W2 = 3 * D        # rows [96,160): [w2 (64,32) | 0]
WROWS = 3 * D + DFF

# ----- vector-pack rows; pack is (NV, 4*D)=(16,128) f32
V_BQKV1, V_BQKV2, V_BO1, V_BO2, V_B1, V_B2 = 0, 1, 2, 3, 4, 5
V_LN1A, V_LN1B, V_LN2A, V_LN2B, V_LN3A, V_LN3B = 6, 7, 8, 9, 10, 11
NV = 16


def decoder_block_kernel(x_ref, enc_ref, self_bias_ref, cross_bias_ref,
                         wpack_ref, vpack_ref, out_ref):
    x = x_ref[...]                                   # (BS, D) f32 residual stream
    enc_b = enc_ref[...].astype(jnp.bfloat16)        # (BS, D) bf16 for K/V proj
    self_bias = self_bias_ref[...]                   # (BS, BS) additive, f32
    cross_bias = cross_bias_ref[...]                 # (BS, BS) additive, f32

    def vrow(r, width=D):                            # (1, width) static slice, f32
        return vpack_ref[r:r + 1, :width]

    def buggy_ln(xf, a, b):
        # Faithful to the reference LayerNormalization.forward:
        #   alpha * (x - mean) / bias + std + eps,  std unbiased (ddof=1).
        # Kept entirely in f32.
        mean = jnp.mean(xf, axis=-1, keepdims=True)
        var = jnp.sum((xf - mean) ** 2, axis=-1, keepdims=True) / (D - 1)
        return a * (xf - mean) / b + jnp.sqrt(var) + EPS

    def fused_proj(act_b, att_row, bias_row):
        # One MXU push: (BS, D) @ (D, 4D) -> (BS, 4D) f32, plus packed bias row.
        # Lanes: [0:D)=q (pre-scaled), [D:2D)=k, [2D:3D)=v, [3D:4D)=unused.
        return (jnp.dot(act_b, wpack_ref[att_row:att_row + D, :],
                        preferred_element_type=jnp.float32)
                + vpack_ref[bias_row:bias_row + 1, :])

    def attend(q_src, kv_src, att_row, bo, bias):
        # Batched-over-B multi-head attention: both batches live on sublanes,
        # cross-batch / masked logits are killed by the additive `bias`.
        # Head-concat is fused into the Wo projection via row-slice accumulation.
        acc = jnp.zeros((BS, D), jnp.float32)
        for h in range(H):                                        # static unroll
            qh = q_src[:, h * DK:(h + 1) * DK]                    # (BS, DK) bf16
            kh = kv_src[:, D + h * DK:D + (h + 1) * DK]
            vh = kv_src[:, 2 * D + h * DK:2 * D + (h + 1) * DK]
            # contract dim 1 of both operands -> no explicit transpose of k
            s = lax.dot_general(qh, kh, (((1,), (1,)), ((), ())),
                                preferred_element_type=jnp.float32)  # (BS, BS)
            s = s + bias
            s = s - jnp.max(s, axis=-1, keepdims=True)
            p = jnp.exp(s)
            p = p * pl.reciprocal(jnp.sum(p, axis=-1, keepdims=True),
                                  approx=True)
            hv = jnp.dot(p.astype(jnp.bfloat16), vh,
                         preferred_element_type=jnp.float32)         # (BS, DK)
            wo_h = wpack_ref[att_row + h * DK:att_row + (h + 1) * DK,
                             3 * D:4 * D]                            # (DK, D) bf16
            acc = acc + jnp.dot(hv.astype(jnp.bfloat16), wo_h,
                                preferred_element_type=jnp.float32)
        return acc + bo

    # ---------- residual 0: masked self-attention (tgt_mask) ----------
    xn = buggy_ln(x, vrow(V_LN1A), vrow(V_LN1B))
    proj = fused_proj(xn.astype(jnp.bfloat16), R_ATT1, V_BQKV1).astype(jnp.bfloat16)
    x = x + attend(proj, proj, R_ATT1, vrow(V_BO1), self_bias)

    # ---------- residual 1: cross-attention vs encoder output (src_mask) ----------
    xn = buggy_ln(x, vrow(V_LN2A), vrow(V_LN2B))
    qp = fused_proj(xn.astype(jnp.bfloat16), R_ATT2, V_BQKV2).astype(jnp.bfloat16)
    kvp = fused_proj(enc_b, R_ATT2, V_BQKV2).astype(jnp.bfloat16)
    x = x + attend(qp, kvp, R_ATT2, vrow(V_BO2), cross_bias)

    # ---------- residual 2: feed-forward ----------
    xn = buggy_ln(x, vrow(V_LN3A), vrow(V_LN3B))
    hdn = (jnp.dot(xn.astype(jnp.bfloat16), wpack_ref[R_W1:R_W1 + D, :DFF],
                   preferred_element_type=jnp.float32)
           + vrow(V_B1, DFF)).astype(jnp.bfloat16)
    ff = jnp.dot(hdn, wpack_ref[R_W2:R_W2 + DFF, :D],
                 preferred_element_type=jnp.float32) + vrow(V_B2)
    out_ref[...] = x + ff


def pack_decoder_params(p):
    """Parameter-only packing; call ONCE outside the per-step hot path."""
    scale = 1.0 / np.sqrt(DK)

    def att_block(wq, wk, wv, wo):
        # fold the 1/sqrt(d_k) scale into Wq at pack time
        return jnp.concatenate([wq * scale, wk, wv, wo], axis=1)      # (D, 4D)

    wpack = jnp.concatenate([
        att_block(p["wq1"], p["wk1"], p["wv1"], p["wo1"]),
        att_block(p["wq2"], p["wk2"], p["wv2"], p["wo2"]),
        jnp.concatenate([p["w1"], jnp.zeros((D, 4 * D - DFF), jnp.float32)], axis=1),
        jnp.concatenate([p["w2"], jnp.zeros((DFF, 3 * D), jnp.float32)], axis=1),
    ], axis=0).astype(jnp.bfloat16)                                    # (WROWS, 128)

    def row(v, width=4 * D):
        v = jnp.asarray(v, jnp.float32).reshape(1, -1)
        return jnp.pad(v, ((0, 0), (0, width - v.shape[1])))

    zerosD = jnp.zeros((1, D), jnp.float32)
    rows = [
        jnp.concatenate([row(p["bq1"] * scale, D), row(p["bk1"], D),
                         row(p["bv1"], D), zerosD], axis=1),           # V_BQKV1
        jnp.concatenate([row(p["bq2"] * scale, D), row(p["bk2"], D),
                         row(p["bv2"], D), zerosD], axis=1),           # V_BQKV2
        row(p["bo1"]), row(p["bo2"]), row(p["b1"]), row(p["b2"]),
        row(p["ln1a"]), row(p["ln1b"]), row(p["ln2a"]), row(p["ln2b"]),
        row(p["ln3a"]), row(p["ln3b"]),
    ]
    rows += [jnp.zeros((1, 4 * D), jnp.float32)] * (NV - len(rows))
    vpack = jnp.concatenate(rows, axis=0)                              # (NV, 128) f32
    return wpack, vpack


@jax.jit
def decoder_block(x, enc, src_mask, tgt_mask, wpack, vpack):
    x_flat = x.reshape(BS, D)
    enc_flat = enc.reshape(BS, D)

    # Block-diagonal additive mask biases, computed wrapper-side (XLA):
    # query row (b,i) may attend to key (c,j) only if c==b AND mask[b,i,j]!=0.
    eye = jnp.eye(B, dtype=jnp.float32)
    tgt_allow = jnp.einsum("bc,bij->bicj", eye,
                           tgt_mask.astype(jnp.float32)).reshape(BS, BS)
    src_full = jnp.broadcast_to(src_mask.astype(jnp.float32), (B, S, S))
    src_allow = jnp.einsum("bc,bij->bicj", eye, src_full).reshape(BS, BS)
    self_bias = jnp.where(tgt_allow == 0, NEG, 0.0).astype(jnp.float32)
    cross_bias = jnp.where(src_allow == 0, NEG, 0.0).astype(jnp.float32)

    out_flat = pl.pallas_call(
        decoder_block_kernel,
        out_shape=jax.ShapeDtypeStruct((BS, D), jnp.float32),
        grid=(1,),                                           # single invocation
        in_specs=[
            pl.BlockSpec((BS, D), lambda i: (0, 0)),         # x (flattened)
            pl.BlockSpec((BS, D), lambda i: (0, 0)),         # encoder output
            pl.BlockSpec((BS, BS), lambda i: (0, 0)),        # self-attn bias
            pl.BlockSpec((BS, BS), lambda i: (0, 0)),        # cross-attn bias
            pl.BlockSpec((WROWS, 4 * D), lambda i: (0, 0)),  # packed matrices (bf16)
            pl.BlockSpec((NV, 4 * D), lambda i: (0, 0)),     # packed vectors (f32)
        ],
        out_specs=pl.BlockSpec((BS, D), lambda i: (0, 0)),
        compiler_params=pltpu.CompilerParams(
            dimension_semantics=("arbitrary",)),
    )(x_flat, enc_flat, self_bias, cross_bias, wpack, vpack)
    return out_flat.reshape(B, S, D)


def decoder_block_ref(x, enc, src_mask, tgt_mask, p):
    """Pure-JAX reference mirroring the PyTorch forward (dropout = identity)."""
    dot = functools.partial(jnp.matmul, precision=jax.lax.Precision.HIGHEST)

    def ln(xb, a, b):
        mean = xb.mean(-1, keepdims=True)
        var = ((xb - mean) ** 2).sum(-1, keepdims=True) / (xb.shape[-1] - 1)
        return a * (xb - mean) / b + jnp.sqrt(var) + EPS

    def mha(qin, kin, vin, mask2d, wq, bq, wk, bk, wv, bv, wo, bo):
        q = dot(qin, wq) + bq
        k = dot(kin, wk) + bk
        v = dot(vin, wv) + bv
        heads = []
        for h in range(H):
            qh, kh, vh = (t[:, h * DK:(h + 1) * DK] for t in (q, k, v))
            s = dot(qh, kh.T) / np.sqrt(DK)
            s = jnp.where(mask2d == 0, -1e9, s)
            heads.append(dot(jax.nn.softmax(s, axis=-1), vh))
        return dot(jnp.concatenate(heads, -1), wo) + bo

    outs = []
    for bi in range(B):
        xb, eb = x[bi], enc[bi]
        tm, sm = tgt_mask[bi], src_mask[bi]                  # (S,S), (1,S)
        xn = ln(xb, p["ln1a"], p["ln1b"])
        xb = xb + mha(xn, xn, xn, tm,
                      p["wq1"], p["bq1"], p["wk1"], p["bk1"],
                      p["wv1"], p["bv1"], p["wo1"], p["bo1"])
        xn = ln(xb, p["ln2a"], p["ln2b"])
        xb = xb + mha(xn, eb, eb, sm,
                      p["wq2"], p["bq2"], p["wk2"], p["bk2"],
                      p["wv2"], p["bv2"], p["wo2"], p["bo2"])
        xn = ln(xb, p["ln3a"], p["ln3b"])
        ff = dot(dot(xn, p["w1"]) + p["b1"], p["w2"]) + p["b2"]
        outs.append(xb + ff)
    return jnp.stack(outs, 0)


if __name__ == "__main__":
    key = jax.random.PRNGKey(0)
    ks = jax.random.split(key, 32)

    x = jax.random.normal(ks[0], (B, S, D), jnp.float32)
    enc = jax.random.normal(ks[1], (B, S, D), jnp.float32)
    # tgt_mask: causal (B, S, S); src_mask: (B, 1, S) with last 2 keys of batch 1 masked
    tgt_mask = jnp.broadcast_to(jnp.tril(jnp.ones((S, S), jnp.float32)), (B, S, S))
    src_mask = jnp.ones((B, 1, S), jnp.float32).at[1, 0, S - 2:].set(0.0)

    init = lambda k, shape, s=0.05: s * jax.random.normal(k, shape, jnp.float32)
    params = {
        # self-attention (weights stored (in, out): y = x @ W + b)
        "wq1": init(ks[2], (D, D)), "bq1": init(ks[3], (D,)),
        "wk1": init(ks[4], (D, D)), "bk1": init(ks[5], (D,)),
        "wv1": init(ks[6], (D, D)), "bv1": init(ks[7], (D,)),
        "wo1": init(ks[8], (D, D)), "bo1": init(ks[9], (D,)),
        # cross-attention
        "wq2": init(ks[10], (D, D)), "bq2": init(ks[11], (D,)),
        "wk2": init(ks[12], (D, D)), "bk2": init(ks[13], (D,)),
        "wv2": init(ks[14], (D, D)), "bv2": init(ks[15], (D,)),
        "wo2": init(ks[16], (D, D)), "bo2": init(ks[17], (D,)),
        # feed-forward
        "w1": init(ks[18], (D, DFF)), "b1": init(ks[19], (DFF,)),
        "w2": init(ks[20], (DFF, D)), "b2": init(ks[21], (D,)),
        # non-zero LN params (torch default bias=0 would divide by zero in the
        # reference module's buggy formula)
        "ln1a": 1.0 + init(ks[22], (D,), 0.02), "ln1b": 1.0 + init(ks[23], (D,), 0.02),
        "ln2a": 1.0 + init(ks[24], (D,), 0.02), "ln2b": 1.0 + init(ks[25], (D,), 0.02),
        "ln3a": 1.0 + init(ks[26], (D,), 0.02), "ln3b": 1.0 + init(ks[27], (D,), 0.02),
    }

    # parameter packs built once, outside the per-call hot path
    wpack, vpack = pack_decoder_params(params)
    jax.block_until_ready((wpack, vpack))

    out = decoder_block(x, enc, src_mask, tgt_mask, wpack, vpack)
    jax.block_until_ready(out)

    ref = decoder_block_ref(x, enc, src_mask, tgt_mask, params)
    # Tolerance reflects bf16 MXU operands (f32 accumulation) vs the f32
    # HIGHEST-precision reference.
    np.testing.assert_allclose(np.asarray(out), np.asarray(ref), rtol=1e-2, atol=1e-2)

    print("KERNEL_OK")
</pallas_src>

<mosaic_0001>
module attributes {stable_mosaic.version = 11 : i64} {
  func.func @decoder_block_kernel(%arg0: i32, %arg1: memref<16x32xf32, #tpu.memory_space<vmem>>, %arg2: memref<16x32xf32, #tpu.memory_space<vmem>>, %arg3: memref<16x16xf32, #tpu.memory_space<vmem>>, %arg4: memref<16x16xf32, #tpu.memory_space<vmem>>, %arg5: memref<160x128xbf16, #tpu.memory_space<vmem>>, %arg6: memref<16x128xf32, #tpu.memory_space<vmem>>, %arg7: memref<16x32xf32, #tpu.memory_space<vmem>>) attributes {dimension_semantics = [#tpu.dimension_semantics<arbitrary>], iteration_bounds = array<i64: 1>, scalar_prefetch = 0 : i64, scratch_operands = 0 : i64, tpu.core_type = #tpu.core_type<tc>, window_params = [{pipeline_mode = #tpu.pipeline_mode<synchronous>, transform_indices = @transform_0, window_bounds = array<i64: 16, 32>}, {pipeline_mode = #tpu.pipeline_mode<synchronous>, transform_indices = @transform_1, window_bounds = array<i64: 16, 32>}, {pipeline_mode = #tpu.pipeline_mode<synchronous>, transform_indices = @transform_2, window_bounds = array<i64: 16, 16>}, {pipeline_mode = #tpu.pipeline_mode<synchronous>, transform_indices = @transform_3, window_bounds = array<i64: 16, 16>}, {pipeline_mode = #tpu.pipeline_mode<synchronous>, transform_indices = @transform_4, window_bounds = array<i64: 160, 128>}, {pipeline_mode = #tpu.pipeline_mode<synchronous>, transform_indices = @transform_5, window_bounds = array<i64: 16, 128>}, {pipeline_mode = #tpu.pipeline_mode<synchronous>, transform_indices = @transform_6, window_bounds = array<i64: 16, 32>}]} {
    %c0 = arith.constant 0 : index
    %c0_0 = arith.constant 0 : index
    %0 = vector.load %arg1[%c0, %c0_0] : memref<16x32xf32, #tpu.memory_space<vmem>>, vector<16x32xf32>
    %c0_1 = arith.constant 0 : index
    %c0_2 = arith.constant 0 : index
    %1 = vector.load %arg2[%c0_1, %c0_2] : memref<16x32xf32, #tpu.memory_space<vmem>>, vector<16x32xf32>
    %2 = arith.truncf %1 : vector<16x32xf32> to vector<16x32xbf16>
    %c0_3 = arith.constant 0 : index
    %c0_4 = arith.constant 0 : index
    %3 = vector.load %arg3[%c0_3, %c0_4] : memref<16x16xf32, #tpu.memory_space<vmem>>, vector<16x16xf32>
    %c0_5 = arith.constant 0 : index
    %c0_6 = arith.constant 0 : index
    %4 = vector.load %arg4[%c0_5, %c0_6] : memref<16x16xf32, #tpu.memory_space<vmem>>, vector<16x16xf32>
    %c6 = arith.constant 6 : index
    %c0_7 = arith.constant 0 : index
    %5 = vector.load %arg6[%c6, %c0_7] : memref<16x128xf32, #tpu.memory_space<vmem>>, vector<1x32xf32>
    %c7 = arith.constant 7 : index
    %c0_8 = arith.constant 0 : index
    %6 = vector.load %arg6[%c7, %c0_8] : memref<16x128xf32, #tpu.memory_space<vmem>>, vector<1x32xf32>
    %cst = arith.constant dense<0.000000e+00> : vector<16xf32>
    %7 = vector.multi_reduction <add>, %0, %cst [1] : vector<16x32xf32> to vector<16xf32>
    %8 = vector.shape_cast %7 : vector<16xf32> to vector<16x1xf32>
    %cst_9 = arith.constant 3.200000e+01 : f32
    %9 = vector.broadcast %cst_9 : f32 to vector<16x1xf32>
    %10 = arith.divf %8, %9 : vector<16x1xf32>
    %11 = vector.broadcast %10 : vector<16x1xf32> to vector<16x32xf32>
    %12 = arith.subf %0, %11 : vector<16x32xf32>
    %13 = arith.mulf %12, %12 : vector<16x32xf32>
    %cst_10 = arith.constant dense<0.000000e+00> : vector<16xf32>
    %14 = vector.multi_reduction <add>, %13, %cst_10 [1] : vector<16x32xf32> to vector<16xf32>
    %15 = vector.shape_cast %14 : vector<16xf32> to vector<16x1xf32>
    %cst_11 = arith.constant 3.100000e+01 : f32
    %16 = vector.broadcast %cst_11 : f32 to vector<16x1xf32>
    %17 = arith.divf %15, %16 : vector<16x1xf32>
    %18 = vector.broadcast %10 : vector<16x1xf32> to vector<16x32xf32>
    %19 = arith.subf %0, %18 : vector<16x32xf32>
    %20 = vector.broadcast %5 : vector<1x32xf32> to vector<16x32xf32>
    %21 = arith.mulf %20, %19 : vector<16x32xf32>
    %22 = vector.broadcast %6 : vector<1x32xf32> to vector<16x32xf32>
    %23 = arith.divf %21, %22 : vector<16x32xf32>
    %24 = math.sqrt %17 : vector<16x1xf32>
    %25 = vector.broadcast %24 : vector<16x1xf32> to vector<16x32xf32>
    %26 = arith.addf %23, %25 : vector<16x32xf32>
    %cst_12 = arith.constant 9.99999997E-7 : f32
    %27 = vector.broadcast %cst_12 : f32 to vector<16x32xf32>
    %28 = arith.addf %26, %27 : vector<16x32xf32>
    %29 = arith.truncf %28 : vector<16x32xf32> to vector<16x32xbf16>
    %c0_13 = arith.constant 0 : index
    %c0_14 = arith.constant 0 : index
    %30 = vector.load %arg5[%c0_13, %c0_14] : memref<160x128xbf16, #tpu.memory_space<vmem>>, vector<32x128xbf16>
    %cst_15 = arith.constant dense<0.000000e+00> : vector<16x128xf32>
    %31 = tpu.matmul %29, %30, %cst_15 {dimension_numbers = #tpu.dot_dimension_numbers<[1], [0], [0], [1], [0, 0, 1, 1], [], []>} : vector<16x32xbf16>, vector<32x128xbf16>, vector<16x128xf32> -> vector<16x128xf32>
    %c0_16 = arith.constant 0 : index
    %c0_17 = arith.constant 0 : index
    %32 = vector.load %arg6[%c0_16, %c0_17] : memref<16x128xf32, #tpu.memory_space<vmem>>, vector<1x128xf32>
    %33 = vector.broadcast %32 : vector<1x128xf32> to vector<16x128xf32>
    %34 = arith.addf %31, %33 : vector<16x128xf32>
    %35 = arith.truncf %34 : vector<16x128xf32> to vector<16x128xbf16>
    %c2 = arith.constant 2 : index
    %c0_18 = arith.constant 0 : index
    %36 = vector.load %arg6[%c2, %c0_18] : memref<16x128xf32, #tpu.memory_space<vmem>>, vector<1x32xf32>
    %cst_19 = arith.constant 0.000000e+00 : f32
    %37 = vector.broadcast %cst_19 : f32 to vector<16x32xf32>
    %38 = vector.extract_strided_slice %35 {offsets = [0, 0], sizes = [16, 8], strides = [1, 1]} : vector<16x128xbf16> to vector<16x8xbf16>
    %39 = vector.extract_strided_slice %35 {offsets = [0, 32], sizes = [16, 8], strides = [1, 1]} : vector<16x128xbf16> to vector<16x8xbf16>
    %40 = vector.extract_strided_slice %35 {offsets = [0, 64], sizes = [16, 8], strides = [1, 1]} : vector<16x128xbf16> to vector<16x8xbf16>
    %cst_20 = arith.constant dense<0.000000e+00> : vector<16x16xf32>
    %41 = tpu.matmul %38, %39, %cst_20 {dimension_numbers = #tpu.dot_dimension_numbers<[1], [1], [0], [0], [0, 0, 1, 0], [], []>} : vector<16x8xbf16>, vector<16x8xbf16>, vector<16x16xf32> -> vector<16x16xf32>
    %42 = arith.addf %41, %3 : vector<16x16xf32>
    %cst_21 = arith.constant dense<0xFF800000> : vector<16xf32>
    %43 = vector.multi_reduction <maximumf>, %42, %cst_21 [1] : vector<16x16xf32> to vector<16xf32>
    %44 = vector.shape_cast %43 : vector<16xf32> to vector<16x1xf32>
    %45 = vector.broadcast %44 : vector<16x1xf32> to vector<16x16xf32>
    %46 = arith.subf %42, %45 : vector<16x16xf32>
    %47 = math.exp %46 : vector<16x16xf32>
    %cst_22 = arith.constant dense<0.000000e+00> : vector<16xf32>
    %48 = vector.multi_reduction <add>, %47, %cst_22 [1] : vector<16x16xf32> to vector<16xf32>
    %49 = vector.shape_cast %48 : vector<16xf32> to vector<16x1xf32>
    %50 = tpu.reciprocal %49 {approx = true} : vector<16x1xf32> -> vector<16x1xf32>
    %51 = vector.broadcast %50 : vector<16x1xf32> to vector<16x16xf32>
    %52 = arith.mulf %47, %51 : vector<16x16xf32>
    %53 = arith.truncf %52 : vector<16x16xf32> to vector<16x16xbf16>
    %cst_23 = arith.constant dense<0.000000e+00> : vector<16x8xf32>
    %54 = tpu.matmul %53, %40, %cst_23 {dimension_numbers = #tpu.dot_dimension_numbers<[1], [0], [0], [1], [0, 0, 1, 1], [], []>} : vector<16x16xbf16>, vector<16x8xbf16>, vector<16x8xf32> -> vector<16x8xf32>
    %c0_24 = arith.constant 0 : index
    %c96 = arith.constant 96 : index
    %55 = vector.load %arg5[%c0_24, %c96] : memref<160x128xbf16, #tpu.memory_space<vmem>>, vector<8x32xbf16>
    %56 = arith.truncf %54 : vector<16x8xf32> to vector<16x8xbf16>
    %cst_25 = arith.constant dense<0.000000e+00> : vector<16x32xf32>
    %57 = tpu.matmul %56, %55, %cst_25 {dimension_numbers = #tpu.dot_dimension_numbers<[1], [0], [0], [1], [0, 0, 1, 1], [], []>} : vector<16x8xbf16>, vector<8x32xbf16>, vector<16x32xf32> -> vector<16x32xf32>
    %58 = arith.addf %37, %57 : vector<16x32xf32>
    %59 = vector.extract_strided_slice %35 {offsets = [0, 8], sizes = [16, 8], strides = [1, 1]} : vector<16x128xbf16> to vector<16x8xbf16>
    %60 = vector.extract_strided_slice %35 {offsets = [0, 40], sizes = [16, 8], strides = [1, 1]} : vector<16x128xbf16> to vector<16x8xbf16>
    %61 = vector.extract_strided_slice %35 {offsets = [0, 72], sizes = [16, 8], strides = [1, 1]} : vector<16x128xbf16> to vector<16x8xbf16>
    %cst_26 = arith.constant dense<0.000000e+00> : vector<16x16xf32>
    %62 = tpu.matmul %59, %60, %cst_26 {dimension_numbers = #tpu.dot_dimension_numbers<[1], [1], [0], [0], [0, 0, 1, 0], [], []>} : vector<16x8xbf16>, vector<16x8xbf16>, vector<16x16xf32> -> vector<16x16xf32>
    %63 = arith.addf %62, %3 : vector<16x16xf32>
    %cst_27 = arith.constant dense<0xFF800000> : vector<16xf32>
    %64 = vector.multi_reduction <maximumf>, %63, %cst_27 [1] : vector<16x16xf32> to vector<16xf32>
    %65 = vector.shape_cast %64 : vector<16xf32> to vector<16x1xf32>
    %66 = vector.broadcast %65 : vector<16x1xf32> to vector<16x16xf32>
    %67 = arith.subf %63, %66 : vector<16x16xf32>
    %68 = math.exp %67 : vector<16x16xf32>
    %cst_28 = arith.constant dense<0.000000e+00> : vector<16xf32>
    %69 = vector.multi_reduction <add>, %68, %cst_28 [1] : vector<16x16xf32> to vector<16xf32>
    %70 = vector.shape_cast %69 : vector<16xf32> to vector<16x1xf32>
    %71 = tpu.reciprocal %70 {approx = true} : vector<16x1xf32> -> vector<16x1xf32>
    %72 = vector.broadcast %71 : vector<16x1xf32> to vector<16x16xf32>
    %73 = arith.mulf %68, %72 : vector<16x16xf32>
    %74 = arith.truncf %73 : vector<16x16xf32> to vector<16x16xbf16>
    %cst_29 = arith.constant dense<0.000000e+00> : vector<16x8xf32>
    %75 = tpu.matmul %74, %61, %cst_29 {dimension_numbers = #tpu.dot_dimension_numbers<[1], [0], [0], [1], [0, 0, 1, 1], [], []>} : vector<16x16xbf16>, vector<16x8xbf16>, vector<16x8xf32> -> vector<16x8xf32>
    %c8 = arith.constant 8 : index
    %c96_30 = arith.constant 96 : index
    %76 = vector.load %arg5[%c8, %c96_30] : memref<160x128xbf16, #tpu.memory_space<vmem>>, vector<8x32xbf16>
    %77 = arith.truncf %75 : vector<16x8xf32> to vector<16x8xbf16>
    %cst_31 = arith.constant dense<0.000000e+00> : vector<16x32xf32>
    %78 = tpu.matmul %77, %76, %cst_31 {dimension_numbers = #tpu.dot_dimension_numbers<[1], [0], [0], [1], [0, 0, 1, 1], [], []>} : vector<16x8xbf16>, vector<8x32xbf16>, vector<16x32xf32> -> vector<16x32xf32>
    %79 = arith.addf %58, %78 : vector<16x32xf32>
    %80 = vector.extract_strided_slice %35 {offsets = [0, 16], sizes = [16, 8], strides = [1, 1]} : vector<16x128xbf16> to vector<16x8xbf16>
    %81 = vector.extract_strided_slice %35 {offsets = [0, 48], sizes = [16, 8], strides = [1, 1]} : vector<16x128xbf16> to vector<16x8xbf16>
    %82 = vector.extract_strided_slice %35 {offsets = [0, 80], sizes = [16, 8], strides = [1, 1]} : vector<16x128xbf16> to vector<16x8xbf16>
    %cst_32 = arith.constant dense<0.000000e+00> : vector<16x16xf32>
    %83 = tpu.matmul %80, %81, %cst_32 {dimension_numbers = #tpu.dot_dimension_numbers<[1], [1], [0], [0], [0, 0, 1, 0], [], []>} : vector<16x8xbf16>, vector<16x8xbf16>, vector<16x16xf32> -> vector<16x16xf32>
    %84 = arith.addf %83, %3 : vector<16x16xf32>
    %cst_33 = arith.constant dense<0xFF800000> : vector<16xf32>
    %85 = vector.multi_reduction <maximumf>, %84, %cst_33 [1] : vector<16x16xf32> to vector<16xf32>
    %86 = vector.shape_cast %85 : vector<16xf32> to vector<16x1xf32>
    %87 = vector.broadcast %86 : vector<16x1xf32> to vector<16x16xf32>
    %88 = arith.subf %84, %87 : vector<16x16xf32>
    %89 = math.exp %88 : vector<16x16xf32>
    %cst_34 = arith.constant dense<0.000000e+00> : vector<16xf32>
    %90 = vector.multi_reduction <add>, %89, %cst_34 [1] : vector<16x16xf32> to vector<16xf32>
    %91 = vector.shape_cast %90 : vector<16xf32> to vector<16x1xf32>
    %92 = tpu.reciprocal %91 {approx = true} : vector<16x1xf32> -> vector<16x1xf32>
    %93 = vector.broadcast %92 : vector<16x1xf32> to vector<16x16xf32>
    %94 = arith.mulf %89, %93 : vector<16x16xf32>
    %95 = arith.truncf %94 : vector<16x16xf32> to vector<16x16xbf16>
    %cst_35 = arith.constant dense<0.000000e+00> : vector<16x8xf32>
    %96 = tpu.matmul %95, %82, %cst_35 {dimension_numbers = #tpu.dot_dimension_numbers<[1], [0], [0], [1], [0, 0, 1, 1], [], []>} : vector<16x16xbf16>, vector<16x8xbf16>, vector<16x8xf32> -> vector<16x8xf32>
    %c16 = arith.constant 16 : index
    %c96_36 = arith.constant 96 : index
    %97 = vector.load %arg5[%c16, %c96_36] : memref<160x128xbf16, #tpu.memory_space<vmem>>, vector<8x32xbf16>
    %98 = arith.truncf %96 : vector<16x8xf32> to vector<16x8xbf16>
    %cst_37 = arith.constant dense<0.000000e+00> : vector<16x32xf32>
    %99 = tpu.matmul %98, %97, %cst_37 {dimension_numbers = #tpu.dot_dimension_numbers<[1], [0], [0], [1], [0, 0, 1, 1], [], []>} : vector<16x8xbf16>, vector<8x32xbf16>, vector<16x32xf32> -> vector<16x32xf32>
    %100 = arith.addf %79, %99 : vector<16x32xf32>
    %101 = vector.extract_strided_slice %35 {offsets = [0, 24], sizes = [16, 8], strides = [1, 1]} : vector<16x128xbf16> to vector<16x8xbf16>
    %102 = vector.extract_strided_slice %35 {offsets = [0, 56], sizes = [16, 8], strides = [1, 1]} : vector<16x128xbf16> to vector<16x8xbf16>
    %103 = vector.extract_strided_slice %35 {offsets = [0, 88], sizes = [16, 8], strides = [1, 1]} : vector<16x128xbf16> to vector<16x8xbf16>
    %cst_38 = arith.constant dense<0.000000e+00> : vector<16x16xf32>
    %104 = tpu.matmul %101, %102, %cst_38 {dimension_numbers = #tpu.dot_dimension_numbers<[1], [1], [0], [0], [0, 0, 1, 0], [], []>} : vector<16x8xbf16>, vector<16x8xbf16>, vector<16x16xf32> -> vector<16x16xf32>
    %105 = arith.addf %104, %3 : vector<16x16xf32>
    %cst_39 = arith.constant dense<0xFF800000> : vector<16xf32>
    %106 = vector.multi_reduction <maximumf>, %105, %cst_39 [1] : vector<16x16xf32> to vector<16xf32>
    %107 = vector.shape_cast %106 : vector<16xf32> to vector<16x1xf32>
    %108 = vector.broadcast %107 : vector<16x1xf32> to vector<16x16xf32>
    %109 = arith.subf %105, %108 : vector<16x16xf32>
    %110 = math.exp %109 : vector<16x16xf32>
    %cst_40 = arith.constant dense<0.000000e+00> : vector<16xf32>
    %111 = vector.multi_reduction <add>, %110, %cst_40 [1] : vector<16x16xf32> to vector<16xf32>
    %112 = vector.shape_cast %111 : vector<16xf32> to vector<16x1xf32>
    %113 = tpu.reciprocal %112 {approx = true} : vector<16x1xf32> -> vector<16x1xf32>
    %114 = vector.broadcast %113 : vector<16x1xf32> to vector<16x16xf32>
    %115 = arith.mulf %110, %114 : vector<16x16xf32>
    %116 = arith.truncf %115 : vector<16x16xf32> to vector<16x16xbf16>
    %cst_41 = arith.constant dense<0.000000e+00> : vector<16x8xf32>
    %117 = tpu.matmul %116, %103, %cst_41 {dimension_numbers = #tpu.dot_dimension_numbers<[1], [0], [0], [1], [0, 0, 1, 1], [], []>} : vector<16x16xbf16>, vector<16x8xbf16>, vector<16x8xf32> -> vector<16x8xf32>
    %c24 = arith.constant 24 : index
    %c96_42 = arith.constant 96 : index
    %118 = vector.load %arg5[%c24, %c96_42] : memref<160x128xbf16, #tpu.memory_space<vmem>>, vector<8x32xbf16>
    %119 = arith.truncf %117 : vector<16x8xf32> to vector<16x8xbf16>
    %cst_43 = arith.constant dense<0.000000e+00> : vector<16x32xf32>
    %120 = tpu.matmul %119, %118, %cst_43 {dimension_numbers = #tpu.dot_dimension_numbers<[1], [0], [0], [1], [0, 0, 1, 1], [], []>} : vector<16x8xbf16>, vector<8x32xbf16>, vector<16x32xf32> -> vector<16x32xf32>
    %121 = arith.addf %100, %120 : vector<16x32xf32>
    %122 = vector.broadcast %36 : vector<1x32xf32> to vector<16x32xf32>
    %123 = arith.addf %121, %122 : vector<16x32xf32>
    %124 = arith.addf %0, %123 : vector<16x32xf32>
    %c8_44 = arith.constant 8 : index
    %c0_45 = arith.constant 0 : index
    %125 = vector.load %arg6[%c8_44, %c0_45] : memref<16x128xf32, #tpu.memory_space<vmem>>, vector<1x32xf32>
    %c9 = arith.constant 9 : index
    %c0_46 = arith.constant 0 : index
    %126 = vector.load %arg6[%c9, %c0_46] : memref<16x128xf32, #tpu.memory_space<vmem>>, vector<1x32xf32>
    %cst_47 = arith.constant dense<0.000000e+00> : vector<16xf32>
    %127 = vector.multi_reduction <add>, %124, %cst_47 [1] : vector<16x32xf32> to vector<16xf32>
    %128 = vector.shape_cast %127 : vector<16xf32> to vector<16x1xf32>
    %cst_48 = arith.constant 3.200000e+01 : f32
    %129 = vector.broadcast %cst_48 : f32 to vector<16x1xf32>
    %130 = arith.divf %128, %129 : vector<16x1xf32>
    %131 = vector.broadcast %130 : vector<16x1xf32> to vector<16x32xf32>
    %132 = arith.subf %124, %131 : vector<16x32xf32>
    %133 = arith.mulf %132, %132 : vector<16x32xf32>
    %cst_49 = arith.constant dense<0.000000e+00> : vector<16xf32>
    %134 = vector.multi_reduction <add>, %133, %cst_49 [1] : vector<16x32xf32> to vector<16xf32>
    %135 = vector.shape_cast %134 : vector<16xf32> to vector<16x1xf32>
    %cst_50 = arith.constant 3.100000e+01 : f32
    %136 = vector.broadcast %cst_50 : f32 to vector<16x1xf32>
    %137 = arith.divf %135, %136 : vector<16x1xf32>
    %138 = vector.broadcast %130 : vector<16x1xf32> to vector<16x32xf32>
    %139 = arith.subf %124, %138 : vector<16x32xf32>
    %140 = vector.broadcast %125 : vector<1x32xf32> to vector<16x32xf32>
    %141 = arith.mulf %140, %139 : vector<16x32xf32>
    %142 = vector.broadcast %126 : vector<1x32xf32> to vector<16x32xf32>
    %143 = arith.divf %141, %142 : vector<16x32xf32>
    %144 = math.sqrt %137 : vector<16x1xf32>
    %145 = vector.broadcast %144 : vector<16x1xf32> to vector<16x32xf32>
    %146 = arith.addf %143, %145 : vector<16x32xf32>
    %cst_51 = arith.constant 9.99999997E-7 : f32
    %147 = vector.broadcast %cst_51 : f32 to vector<16x32xf32>
    %148 = arith.addf %146, %147 : vector<16x32xf32>
    %149 = arith.truncf %148 : vector<16x32xf32> to vector<16x32xbf16>
    %c32 = arith.constant 32 : index
    %c0_52 = arith.constant 0 : index
    %150 = vector.load %arg5[%c32, %c0_52] : memref<160x128xbf16, #tpu.memory_space<vmem>>, vector<32x128xbf16>
    %cst_53 = arith.constant dense<0.000000e+00> : vector<16x128xf32>
    %151 = tpu.matmul %149, %150, %cst_53 {dimension_numbers = #tpu.dot_dimension_numbers<[1], [0], [0], [1], [0, 0, 1, 1], [], []>} : vector<16x32xbf16>, vector<32x128xbf16>, vector<16x128xf32> -> vector<16x128xf32>
    %c1 = arith.constant 1 : index
    %c0_54 = arith.constant 0 : index
    %152 = vector.load %arg6[%c1, %c0_54] : memref<16x128xf32, #tpu.memory_space<vmem>>, vector<1x128xf32>
    %153 = vector.broadcast %152 : vector<1x128xf32> to vector<16x128xf32>
    %154 = arith.addf %151, %153 : vector<16x128xf32>
    %155 = arith.truncf %154 : vector<16x128xf32> to vector<16x128xbf16>
    %c32_55 = arith.constant 32 : index
    %c0_56 = arith.constant 0 : index
    %156 = vector.load %arg5[%c32_55, %c0_56] : memref<160x128xbf16, #tpu.memory_space<vmem>>, vector<32x128xbf16>
    %cst_57 = arith.constant dense<0.000000e+00> : vector<16x128xf32>
    %157 = tpu.matmul %2, %156, %cst_57 {dimension_numbers = #tpu.dot_dimension_numbers<[1], [0], [0], [1], [0, 0, 1, 1], [], []>} : vector<16x32xbf16>, vector<32x128xbf16>, vector<16x128xf32> -> vector<16x128xf32>
    %c1_58 = arith.constant 1 : index
    %c0_59 = arith.constant 0 : index
    %158 = vector.load %arg6[%c1_58, %c0_59] : memref<16x128xf32, #tpu.memory_space<vmem>>, vector<1x128xf32>
    %159 = vector.broadcast %158 : vector<1x128xf32> to vector<16x128xf32>
    %160 = arith.addf %157, %159 : vector<16x128xf32>
    %161 = arith.truncf %160 : vector<16x128xf32> to vector<16x128xbf16>
    %c3 = arith.constant 3 : index
    %c0_60 = arith.constant 0 : index
    %162 = vector.load %arg6[%c3, %c0_60] : memref<16x128xf32, #tpu.memory_space<vmem>>, vector<1x32xf32>
    %cst_61 = arith.constant 0.000000e+00 : f32
    %163 = vector.broadcast %cst_61 : f32 to vector<16x32xf32>
    %164 = vector.extract_strided_slice %155 {offsets = [0, 0], sizes = [16, 8], strides = [1, 1]} : vector<16x128xbf16> to vector<16x8xbf16>
    %165 = vector.extract_strided_slice %161 {offsets = [0, 32], sizes = [16, 8], strides = [1, 1]} : vector<16x128xbf16> to vector<16x8xbf16>
    %166 = vector.extract_strided_slice %161 {offsets = [0, 64], sizes = [16, 8], strides = [1, 1]} : vector<16x128xbf16> to vector<16x8xbf16>
    %cst_62 = arith.constant dense<0.000000e+00> : vector<16x16xf32>
    %167 = tpu.matmul %164, %165, %cst_62 {dimension_numbers = #tpu.dot_dimension_numbers<[1], [1], [0], [0], [0, 0, 1, 0], [], []>} : vector<16x8xbf16>, vector<16x8xbf16>, vector<16x16xf32> -> vector<16x16xf32>
    %168 = arith.addf %167, %4 : vector<16x16xf32>
    %cst_63 = arith.constant dense<0xFF800000> : vector<16xf32>
    %169 = vector.multi_reduction <maximumf>, %168, %cst_63 [1] : vector<16x16xf32> to vector<16xf32>
    %170 = vector.shape_cast %169 : vector<16xf32> to vector<16x1xf32>
    %171 = vector.broadcast %170 : vector<16x1xf32> to vector<16x16xf32>
    %172 = arith.subf %168, %171 : vector<16x16xf32>
    %173 = math.exp %172 : vector<16x16xf32>
    %cst_64 = arith.constant dense<0.000000e+00> : vector<16xf32>
    %174 = vector.multi_reduction <add>, %173, %cst_64 [1] : vector<16x16xf32> to vector<16xf32>
    %175 = vector.shape_cast %174 : vector<16xf32> to vector<16x1xf32>
    %176 = tpu.reciprocal %175 {approx = true} : vector<16x1xf32> -> vector<16x1xf32>
    %177 = vector.broadcast %176 : vector<16x1xf32> to vector<16x16xf32>
    %178 = arith.mulf %173, %177 : vector<16x16xf32>
    %179 = arith.truncf %178 : vector<16x16xf32> to vector<16x16xbf16>
    %cst_65 = arith.constant dense<0.000000e+00> : vector<16x8xf32>
    %180 = tpu.matmul %179, %166, %cst_65 {dimension_numbers = #tpu.dot_dimension_numbers<[1], [0], [0], [1], [0, 0, 1, 1], [], []>} : vector<16x16xbf16>, vector<16x8xbf16>, vector<16x8xf32> -> vector<16x8xf32>
    %c32_66 = arith.constant 32 : index
    %c96_67 = arith.constant 96 : index
    %181 = vector.load %arg5[%c32_66, %c96_67] : memref<160x128xbf16, #tpu.memory_space<vmem>>, vector<8x32xbf16>
    %182 = arith.truncf %180 : vector<16x8xf32> to vector<16x8xbf16>
    %cst_68 = arith.constant dense<0.000000e+00> : vector<16x32xf32>
    %183 = tpu.matmul %182, %181, %cst_68 {dimension_numbers = #tpu.dot_dimension_numbers<[1], [0], [0], [1], [0, 0, 1, 1], [], []>} : vector<16x8xbf16>, vector<8x32xbf16>, vector<16x32xf32> -> vector<16x32xf32>
    %184 = arith.addf %163, %183 : vector<16x32xf32>
    %185 = vector.extract_strided_slice %155 {offsets = [0, 8], sizes = [16, 8], strides = [1, 1]} : vector<16x128xbf16> to vector<16x8xbf16>
    %186 = vector.extract_strided_slice %161 {offsets = [0, 40], sizes = [16, 8], strides = [1, 1]} : vector<16x128xbf16> to vector<16x8xbf16>
    %187 = vector.extract_strided_slice %161 {offsets = [0, 72], sizes = [16, 8], strides = [1, 1]} : vector<16x128xbf16> to vector<16x8xbf16>
    %cst_69 = arith.constant dense<0.000000e+00> : vector<16x16xf32>
    %188 = tpu.matmul %185, %186, %cst_69 {dimension_numbers = #tpu.dot_dimension_numbers<[1], [1], [0], [0], [0, 0, 1, 0], [], []>} : vector<16x8xbf16>, vector<16x8xbf16>, vector<16x16xf32> -> vector<16x16xf32>
    %189 = arith.addf %188, %4 : vector<16x16xf32>
    %cst_70 = arith.constant dense<0xFF800000> : vector<16xf32>
    %190 = vector.multi_reduction <maximumf>, %189, %cst_70 [1] : vector<16x16xf32> to vector<16xf32>
    %191 = vector.shape_cast %190 : vector<16xf32> to vector<16x1xf32>
    %192 = vector.broadcast %191 : vector<16x1xf32> to vector<16x16xf32>
    %193 = arith.subf %189, %192 : vector<16x16xf32>
    %194 = math.exp %193 : vector<16x16xf32>
    %cst_71 = arith.constant dense<0.000000e+00> : vector<16xf32>
    %195 = vector.multi_reduction <add>, %194, %cst_71 [1] : vector<16x16xf32> to vector<16xf32>
    %196 = vector.shape_cast %195 : vector<16xf32> to vector<16x1xf32>
    %197 = tpu.reciprocal %196 {approx = true} : vector<16x1xf32> -> vector<16x1xf32>
    %198 = vector.broadcast %197 : vector<16x1xf32> to vector<16x16xf32>
    %199 = arith.mulf %194, %198 : vector<16x16xf32>
    %200 = arith.truncf %199 : vector<16x16xf32> to vector<16x16xbf16>
    %cst_72 = arith.constant dense<0.000000e+00> : vector<16x8xf32>
    %201 = tpu.matmul %200, %187, %cst_72 {dimension_numbers = #tpu.dot_dimension_numbers<[1], [0], [0], [1], [0, 0, 1, 1], [], []>} : vector<16x16xbf16>, vector<16x8xbf16>, vector<16x8xf32> -> vector<16x8xf32>
    %c40 = arith.constant 40 : index
    %c96_73 = arith.constant 96 : index
    %202 = vector.load %arg5[%c40, %c96_73] : memref<160x128xbf16, #tpu.memory_space<vmem>>, vector<8x32xbf16>
    %203 = arith.truncf %201 : vector<16x8xf32> to vector<16x8xbf16>
    %cst_74 = arith.constant dense<0.000000e+00> : vector<16x32xf32>
    %204 = tpu.matmul %203, %202, %cst_74 {dimension_numbers = #tpu.dot_dimension_numbers<[1], [0], [0], [1], [0, 0, 1, 1], [], []>} : vector<16x8xbf16>, vector<8x32xbf16>, vector<16x32xf32> -> vector<16x32xf32>
    %205 = arith.addf %184, %204 : vector<16x32xf32>
    %206 = vector.extract_strided_slice %155 {offsets = [0, 16], sizes = [16, 8], strides = [1, 1]} : vector<16x128xbf16> to vector<16x8xbf16>
    %207 = vector.extract_strided_slice %161 {offsets = [0, 48], sizes = [16, 8], strides = [1, 1]} : vector<16x128xbf16> to vector<16x8xbf16>
    %208 = vector.extract_strided_slice %161 {offsets = [0, 80], sizes = [16, 8], strides = [1, 1]} : vector<16x128xbf16> to vector<16x8xbf16>
    %cst_75 = arith.constant dense<0.000000e+00> : vector<16x16xf32>
    %209 = tpu.matmul %206, %207, %cst_75 {dimension_numbers = #tpu.dot_dimension_numbers<[1], [1], [0], [0], [0, 0, 1, 0], [], []>} : vector<16x8xbf16>, vector<16x8xbf16>, vector<16x16xf32> -> vector<16x16xf32>
    %210 = arith.addf %209, %4 : vector<16x16xf32>
    %cst_76 = arith.constant dense<0xFF800000> : vector<16xf32>
    %211 = vector.multi_reduction <maximumf>, %210, %cst_76 [1] : vector<16x16xf32> to vector<16xf32>
    %212 = vector.shape_cast %211 : vector<16xf32> to vector<16x1xf32>
    %213 = vector.broadcast %212 : vector<16x1xf32> to vector<16x16xf32>
    %214 = arith.subf %210, %213 : vector<16x16xf32>
    %215 = math.exp %214 : vector<16x16xf32>
    %cst_77 = arith.constant dense<0.000000e+00> : vector<16xf32>
    %216 = vector.multi_reduction <add>, %215, %cst_77 [1] : vector<16x16xf32> to vector<16xf32>
    %217 = vector.shape_cast %216 : vector<16xf32> to vector<16x1xf32>
    %218 = tpu.reciprocal %217 {approx = true} : vector<16x1xf32> -> vector<16x1xf32>
    %219 = vector.broadcast %218 : vector<16x1xf32> to vector<16x16xf32>
    %220 = arith.mulf %215, %219 : vector<16x16xf32>
    %221 = arith.truncf %220 : vector<16x16xf32> to vector<16x16xbf16>
    %cst_78 = arith.constant dense<0.000000e+00> : vector<16x8xf32>
    %222 = tpu.matmul %221, %208, %cst_78 {dimension_numbers = #tpu.dot_dimension_numbers<[1], [0], [0], [1], [0, 0, 1, 1], [], []>} : vector<16x16xbf16>, vector<16x8xbf16>, vector<16x8xf32> -> vector<16x8xf32>
    %c48 = arith.constant 48 : index
    %c96_79 = arith.constant 96 : index
    %223 = vector.load %arg5[%c48, %c96_79] : memref<160x128xbf16, #tpu.memory_space<vmem>>, vector<8x32xbf16>
    %224 = arith.truncf %222 : vector<16x8xf32> to vector<16x8xbf16>
    %cst_80 = arith.constant dense<0.000000e+00> : vector<16x32xf32>
    %225 = tpu.matmul %224, %223, %cst_80 {dimension_numbers = #tpu.dot_dimension_numbers<[1], [0], [0], [1], [0, 0, 1, 1], [], []>} : vector<16x8xbf16>, vector<8x32xbf16>, vector<16x32xf32> -> vector<16x32xf32>
    %226 = arith.addf %205, %225 : vector<16x32xf32>
    %227 = vector.extract_strided_slice %155 {offsets = [0, 24], sizes = [16, 8], strides = [1, 1]} : vector<16x128xbf16> to vector<16x8xbf16>
    %228 = vector.extract_strided_slice %161 {offsets = [0, 56], sizes = [16, 8], strides = [1, 1]} : vector<16x128xbf16> to vector<16x8xbf16>
    %229 = vector.extract_strided_slice %161 {offsets = [0, 88], sizes = [16, 8], strides = [1, 1]} : vector<16x128xbf16> to vector<16x8xbf16>
    %cst_81 = arith.constant dense<0.000000e+00> : vector<16x16xf32>
    %230 = tpu.matmul %227, %228, %cst_81 {dimension_numbers = #tpu.dot_dimension_numbers<[1], [1], [0], [0], [0, 0, 1, 0], [], []>} : vector<16x8xbf16>, vector<16x8xbf16>, vector<16x16xf32> -> vector<16x16xf32>
    %231 = arith.addf %230, %4 : vector<16x16xf32>
    %cst_82 = arith.constant dense<0xFF800000> : vector<16xf32>
    %232 = vector.multi_reduction <maximumf>, %231, %cst_82 [1] : vector<16x16xf32> to vector<16xf32>
    %233 = vector.shape_cast %232 : vector<16xf32> to vector<16x1xf32>
    %234 = vector.broadcast %233 : vector<16x1xf32> to vector<16x16xf32>
    %235 = arith.subf %231, %234 : vector<16x16xf32>
    %236 = math.exp %235 : vector<16x16xf32>
    %cst_83 = arith.constant dense<0.000000e+00> : vector<16xf32>
    %237 = vector.multi_reduction <add>, %236, %cst_83 [1] : vector<16x16xf32> to vector<16xf32>
    %238 = vector.shape_cast %237 : vector<16xf32> to vector<16x1xf32>
    %239 = tpu.reciprocal %238 {approx = true} : vector<16x1xf32> -> vector<16x1xf32>
    %240 = vector.broadcast %239 : vector<16x1xf32> to vector<16x16xf32>
    %241 = arith.mulf %236, %240 : vector<16x16xf32>
    %242 = arith.truncf %241 : vector<16x16xf32> to vector<16x16xbf16>
    %cst_84 = arith.constant dense<0.000000e+00> : vector<16x8xf32>
    %243 = tpu.matmul %242, %229, %cst_84 {dimension_numbers = #tpu.dot_dimension_numbers<[1], [0], [0], [1], [0, 0, 1, 1], [], []>} : vector<16x16xbf16>, vector<16x8xbf16>, vector<16x8xf32> -> vector<16x8xf32>
    %c56 = arith.constant 56 : index
    %c96_85 = arith.constant 96 : index
    %244 = vector.load %arg5[%c56, %c96_85] : memref<160x128xbf16, #tpu.memory_space<vmem>>, vector<8x32xbf16>
    %245 = arith.truncf %243 : vector<16x8xf32> to vector<16x8xbf16>
    %cst_86 = arith.constant dense<0.000000e+00> : vector<16x32xf32>
    %246 = tpu.matmul %245, %244, %cst_86 {dimension_numbers = #tpu.dot_dimension_numbers<[1], [0], [0], [1], [0, 0, 1, 1], [], []>} : vector<16x8xbf16>, vector<8x32xbf16>, vector<16x32xf32> -> vector<16x32xf32>
    %247 = arith.addf %226, %246 : vector<16x32xf32>
    %248 = vector.broadcast %162 : vector<1x32xf32> to vector<16x32xf32>
    %249 = arith.addf %247, %248 : vector<16x32xf32>
    %250 = arith.addf %124, %249 : vector<16x32xf32>
    %c10 = arith.constant 10 : index
    %c0_87 = arith.constant 0 : index
    %251 = vector.load %arg6[%c10, %c0_87] : memref<16x128xf32, #tpu.memory_space<vmem>>, vector<1x32xf32>
    %c11 = arith.constant 11 : index
    %c0_88 = arith.constant 0 : index
    %252 = vector.load %arg6[%c11, %c0_88] : memref<16x128xf32, #tpu.memory_space<vmem>>, vector<1x32xf32>
    %cst_89 = arith.constant dense<0.000000e+00> : vector<16xf32>
    %253 = vector.multi_reduction <add>, %250, %cst_89 [1] : vector<16x32xf32> to vector<16xf32>
    %254 = vector.shape_cast %253 : vector<16xf32> to vector<16x1xf32>
    %cst_90 = arith.constant 3.200000e+01 : f32
    %255 = vector.broadcast %cst_90 : f32 to vector<16x1xf32>
    %256 = arith.divf %254, %255 : vector<16x1xf32>
    %257 = vector.broadcast %256 : vector<16x1xf32> to vector<16x32xf32>
    %258 = arith.subf %250, %257 : vector<16x32xf32>
    %259 = arith.mulf %258, %258 : vector<16x32xf32>
    %cst_91 = arith.constant dense<0.000000e+00> : vector<16xf32>
    %260 = vector.multi_reduction <add>, %259, %cst_91 [1] : vector<16x32xf32> to vector<16xf32>
    %261 = vector.shape_cast %260 : vector<16xf32> to vector<16x1xf32>
    %cst_92 = arith.constant 3.100000e+01 : f32
    %262 = vector.broadcast %cst_92 : f32 to vector<16x1xf32>
    %263 = arith.divf %261, %262 : vector<16x1xf32>
    %264 = vector.broadcast %256 : vector<16x1xf32> to vector<16x32xf32>
    %265 = arith.subf %250, %264 : vector<16x32xf32>
    %266 = vector.broadcast %251 : vector<1x32xf32> to vector<16x32xf32>
    %267 = arith.mulf %266, %265 : vector<16x32xf32>
    %268 = vector.broadcast %252 : vector<1x32xf32> to vector<16x32xf32>
    %269 = arith.divf %267, %268 : vector<16x32xf32>
    %270 = math.sqrt %263 : vector<16x1xf32>
    %271 = vector.broadcast %270 : vector<16x1xf32> to vector<16x32xf32>
    %272 = arith.addf %269, %271 : vector<16x32xf32>
    %cst_93 = arith.constant 9.99999997E-7 : f32
    %273 = vector.broadcast %cst_93 : f32 to vector<16x32xf32>
    %274 = arith.addf %272, %273 : vector<16x32xf32>
    %275 = arith.truncf %274 : vector<16x32xf32> to vector<16x32xbf16>
    %c64 = arith.constant 64 : index
    %c0_94 = arith.constant 0 : index
    %276 = vector.load %arg5[%c64, %c0_94] : memref<160x128xbf16, #tpu.memory_space<vmem>>, vector<32x64xbf16>
    %cst_95 = arith.constant dense<0.000000e+00> : vector<16x64xf32>
    %277 = tpu.matmul %275, %276, %cst_95 {dimension_numbers = #tpu.dot_dimension_numbers<[1], [0], [0], [1], [0, 0, 1, 1], [], []>} : vector<16x32xbf16>, vector<32x64xbf16>, vector<16x64xf32> -> vector<16x64xf32>
    %c4 = arith.constant 4 : index
    %c0_96 = arith.constant 0 : index
    %278 = vector.load %arg6[%c4, %c0_96] : memref<16x128xf32, #tpu.memory_space<vmem>>, vector<1x64xf32>
    %279 = vector.broadcast %278 : vector<1x64xf32> to vector<16x64xf32>
    %280 = arith.addf %277, %279 : vector<16x64xf32>
    %281 = arith.truncf %280 : vector<16x64xf32> to vector<16x64xbf16>
    %c96_97 = arith.constant 96 : index
    %c0_98 = arith.constant 0 : index
    %282 = vector.load %arg5[%c96_97, %c0_98] : memref<160x128xbf16, #tpu.memory_space<vmem>>, vector<64x32xbf16>
    %cst_99 = arith.constant dense<0.000000e+00> : vector<16x32xf32>
    %283 = tpu.matmul %281, %282, %cst_99 {dimension_numbers = #tpu.dot_dimension_numbers<[1], [0], [0], [1], [0, 0, 1, 1], [], []>} : vector<16x64xbf16>, vector<64x32xbf16>, vector<16x32xf32> -> vector<16x32xf32>
    %c5 = arith.constant 5 : index
    %c0_100 = arith.constant 0 : index
    %284 = vector.load %arg6[%c5, %c0_100] : memref<16x128xf32, #tpu.memory_space<vmem>>, vector<1x32xf32>
    %285 = vector.broadcast %284 : vector<1x32xf32> to vector<16x32xf32>
    %286 = arith.addf %283, %285 : vector<16x32xf32>
    %287 = arith.addf %250, %286 : vector<16x32xf32>
    %c0_101 = arith.constant 0 : index
    %c0_102 = arith.constant 0 : index
    %288 = vector.load %arg7[%c0_101, %c0_102] : memref<16x32xf32, #tpu.memory_space<vmem>>, vector<16x32xf32>
    tpu.vector_store %arg7[%c0_101, %c0_102], %287 {strides = array<i32>} : memref<16x32xf32, #tpu.memory_space<vmem>>, vector<16x32xf32>,
    return
  }
  func.func @transform_0(%arg0: i32) -> (i32, i32) {
    %c0_i32 = arith.constant 0 : i32
    %c0_i32_0 = arith.constant 0 : i32
    %c0_i32_1 = arith.constant 0 : i32
    return %c0_i32, %c0_i32_0 : i32, i32
  }
  func.func @transform_1(%arg0: i32) -> (i32, i32) {
    %c0_i32 = arith.constant 0 : i32
    %c0_i32_0 = arith.constant 0 : i32
    %c0_i32_1 = arith.constant 0 : i32
    return %c0_i32, %c0_i32_0 : i32, i32
  }
  func.func @transform_2(%arg0: i32) -> (i32, i32) {
    %c0_i32 = arith.constant 0 : i32
    %c0_i32_0 = arith.constant 0 : i32
    %c0_i32_1 = arith.constant 0 : i32
    return %c0_i32, %c0_i32_0 : i32, i32
  }
  func.func @transform_3(%arg0: i32) -> (i32, i32) {
    %c0_i32 = arith.constant 0 : i32
    %c0_i32_0 = arith.constant 0 : i32
    %c0_i32_1 = arith.constant 0 : i32
    return %c0_i32, %c0_i32_0 : i32, i32
  }
  func.func @transform_4(%arg0: i32) -> (i32, i32) {
    %c0_i32 = arith.constant 0 : i32
    %c0_i32_0 = arith.constant 0 : i32
    %c0_i32_1 = arith.constant 0 : i32
    return %c0_i32, %c0_i32_0 : i32, i32
  }
  func.func @transform_5(%arg0: i32) -> (i32, i32) {
    %c0_i32 = arith.constant 0 : i32
    %c0_i32_0 = arith.constant 0 : i32
    %c0_i32_1 = arith.constant 0 : i32
    return %c0_i32, %c0_i32_0 : i32, i32
  }
  func.func @transform_6(%arg0: i32) -> (i32, i32) {
    %c0_i32 = arith.constant 0 : i32
    %c0_i32_0 = arith.constant 0 : i32
    %c0_i32_1 = arith.constant 0 : i32
    return %c0_i32, %c0_i32_0 : i32, i32
  }
}

</mosaic_0001>

<llo_original>
// kernel: decoder_block.1
$region0: #{decoder_block.1}
  #allocation0 [shape = 'u32[]', space=smem, size = 0x4, offset = 0x4, fixed_abs, tag = 'smem constant byte address 0x4 - core index']
  #allocation1 [shape = 'u32[144,128]{1,0:T(1,128)}', space=vmem, size = 0x12000, scoped, tag = 'internal scratch']
  %s0 = inlined_call_operand.vmem [shape: f32[16,32], index: 0, kind: input, shape index: {}]
  %s1 = inlined_call_operand.vmem [shape: f32[16,32], index: 1, kind: input, shape index: {}]
  %s2 = inlined_call_operand.vmem [shape: f32[16,16], index: 2, kind: input, shape index: {}]
  %s3 = inlined_call_operand.vmem [shape: f32[16,16], index: 3, kind: input, shape index: {}]
  %s4 = inlined_call_operand.vmem [shape: bf16[160,128], index: 4, kind: input, shape index: {}]
  %s5 = inlined_call_operand.vmem [shape: f32[16,128], index: 5, kind: input, shape index: {}]
  %s6 = inlined_call_operand.hbm [shape: f32[16,32], index: 6, kind: output, shape index: {}]
  %s7 = sld [smem:[#allocation0]]
  $region34: #{decoder_block.1} parent=0
    _
  %s9 = ssub.s32 1, %s7
  %s10 = scalar_select 0, %s9, %s7
  $region1: #{decoder_block.1} parent=0
    #allocation2 [shape = 'u8[8192]{0}', space=vmem, size = 0x2000, scoped, tag = 'output window, operand 0, single buffered']
    #allocation3 [shape = 's32[1]{0}', space=sflag, size = 0x4, scoped, tag = 'scoped memory for decoder_block.1']
    %11 = vsyncpa [#allocation3], 0
    // Predicated region
    $region2: #{decoder_block.1} parent=1 // pred_check
      _
    $region3: #{decoder_block.1} parent=1 // pred_check_branch
      %13 = sbr.rel (0) target = $region5
    $region4: #{decoder_block.1} parent=1 // pred_region
      _
    $region5: #{decoder_block.1} parent=1 // pred_fallthru
      _
    // Predicated region
    $region6: #{decoder_block.1} parent=1 // pred_check
      _
    $region7: #{decoder_block.1} parent=1 // pred_check_branch
      %15 = sbr.rel (0) target = $region9
    $region8: #{decoder_block.1} parent=1 // pred_region
      _
    $region9: #{decoder_block.1} parent=1 // pred_fallthru
      _
    // Predicated region
    $region10: #{decoder_block.1} parent=1 // pred_check
      _
    $region11: #{decoder_block.1} parent=1 // pred_check_branch
      %17 = sbr.rel (0) target = $region13
    $region12: #{decoder_block.1} parent=1 // pred_region
      _
    $region13: #{decoder_block.1} parent=1 // pred_fallthru
      _
    // Predicated region
    $region14: #{decoder_block.1} parent=1 // pred_check
      _
    $region15: #{decoder_block.1} parent=1 // pred_check_branch
      %19 = sbr.rel (0) target = $region17
    $region16: #{decoder_block.1} parent=1 // pred_region
      _
    $region17: #{decoder_block.1} parent=1 // pred_fallthru
      _
    // Predicated region
    $region18: #{decoder_block.1} parent=1 // pred_check
      _
    $region19: #{decoder_block.1} parent=1 // pred_check_branch
      %21 = sbr.rel (0) target = $region21
    $region20: #{decoder_block.1} parent=1 // pred_region
      _
    $region21: #{decoder_block.1} parent=1 // pred_fallthru
      _
    // Predicated region
    $region22: #{decoder_block.1} parent=1 // pred_check
      _
    $region23: #{decoder_block.1} parent=1 // pred_check_branch
      %23 = sbr.rel (0) target = $region25
    $region24: #{decoder_block.1} parent=1 // pred_region
      _
    $region25: #{decoder_block.1} parent=1 // pred_fallthru
      _
    %v25 = vld [vmem:[%s0] sm:$0xff]
    %v26 = vld [vmem:[%s0 + $0x8] sm:$0xff]
    %v27 = vld [vmem:[%s1] sm:$0xff]
    %v28 = vld [vmem:[%s1 + $0x8] sm:$0xff]
    %v29 = vpack.c.bf16 %v28, %v27
    %v30 = vld [vmem:[%s2] sm:$0xff]
    %v31 = vld [vmem:[%s2 + $0x8] sm:$0xff]
    %v32 = vld [vmem:[%s3] sm:$0xff]
    %v33 = vld [vmem:[%s3 + $0x8] sm:$0xff]
    %v34 = vld [vmem:[%s5 + $0x6] sm:$0x1]
    %v35 = vld [vmem:[%s5 + $0x7] sm:$0x1]
    %vm36 = vcmask 261120
    %v37 = vsel %vm36, %v25, 0.0
    %38 = vadd.xlane.f32.xlu0 %v37
    %v39 = vpop.xlane.xlu0 %38
    %v40 = vsel %vm36, %v26, 0.0
    %41 = vadd.xlane.f32.xlu0 %v40
    %v42 = vpop.xlane.xlu0 %41
    %v43 = vrcp.pop 32.0
    %v44 = vmul.f32 %v39, %v43
    %v45 = vmul.f32 %v42, %v43
    %v46 = vsub.f32 %v25, %v44
    %v47 = vsub.f32 %v26, %v45
    %v48 = vmul.f32 %v46, %v46
    %v49 = vmul.f32 %v47, %v47
    %v50 = vsel %vm36, %v48, 0.0
    %51 = vadd.xlane.f32.xlu0 %v50
    %v52 = vpop.xlane.xlu0 %51
    %v53 = vsel %vm36, %v49, 0.0
    %54 = vadd.xlane.f32.xlu0 %v53
    %v55 = vpop.xlane.xlu0 %54
    %v56 = vrcp.pop 31.0
    %v57 = vmul.f32 %v52, %v56
    %v58 = vmul.f32 %v55, %v56
    %v59 = vlaneseq
    %v60 = vshrl.u32 %v59, 7
    %v61 = vsub.s32 0, %v60
    %v62 = vrot.slane %v34, %v61
    %v63 = vmul.f32 %v62, %v46
    %v64 = vmul.f32 %v62, %v47
    %v65 = vlaneseq
    %v66 = vshrl.u32 %v65, 7
    %v67 = vsub.s32 0, %v66
    %v68 = vrot.slane %v35, %v67
    %v69 = vrcp.pop %v68
    %v70 = vmul.f32 %v63, %v69
    %v71 = vmul.f32 %v64, %v69
    %v72 = vrsqrt.pop %v57
    %v73 = vmul.f32 %v57, %v72
    %vm74 = vcmp.eq.f32.partialorder %v57, inf
    %v75 = vsel %vm74, %v57, %v73
    %vm76 = vcmp.eq.f32.partialorder %v57, 0.0
    %v77 = vand.u32 %v57, 2147483648
    %v78 = vsel %vm76, %v77, %v75
    %v79 = vrsqrt.pop %v58
    %v80 = vmul.f32 %v58, %v79
    %vm81 = vcmp.eq.f32.partialorder %v58, inf
    %v82 = vsel %vm81, %v58, %v80
    %vm83 = vcmp.eq.f32.partialorder %v58, 0.0
    %v84 = vand.u32 %v58, 2147483648
    %v85 = vsel %vm83, %v84, %v82
    %v86 = vadd.f32 %v70, %v78
    %v87 = vadd.f32 %v71, %v85
    %v88 = vadd.f32 %v86, 1e-06
    %v89 = vadd.f32 %v87, 1e-06
    %v90 = vpack.c.bf16 %v89, %v88
    %v91 = vld [vmem:[%s4] sm:$0xf]
    %v92 = vld [vmem:[%s4 + $0x4] sm:$0xf]
    %v93 = vld [vmem:[%s4 + $0x8] sm:$0xf]
    %v94 = vld [vmem:[%s4 + $0xc] sm:$0xf]
    %v95 = vld [vmem:[%s5] sm:$0x1]
    %v96 = vlaneseq
    %v97 = vshrl.u32 %v96, 7
    %v98 = vsub.s32 0, %v97
    %v99 = vrot.slane %v95, %v98
    %v104 = vunpack.c.l.b16 %v91
    %v105 = vunpack.c.l.b16 %v92
    %v106 = vunpack.c.l.b16 %v93
    %v107 = vunpack.c.l.b16 %v94
    %v108 = vpack.c.b16 %v105, %v104
    %v109 = vpack.c.b16 %v107, %v106
    %v113 = vsel %vm36, %v90, 0
    %115 = vmatprep.subr.bf16.mxu0 0
    %116 = vmatpush1.bf16.msra.mxu0 %v108
    %117 = vmatprep.subr.bf16.mxu0 0
    %118 = vmatpush1.bf16.msra.mxu0 %v109
    %119 = vmatprep.subr.bf16.mxu0 0
    %120 = vmatpush1.bf16.msra.mxu0 0
    %121 = vmatprep.subr.bf16.mxu0 0
    %122 = vmatpush1.bf16.msra.mxu0 0
    %123 = vmatprep.subr.bf16.mxu0 0
    %124 = vmatpush1.bf16.msra.mxu0 0
    %125 = vmatprep.subr.bf16.mxu0 0
    %126 = vmatpush1.bf16.msra.mxu0 0
    %127 = vmatprep.subr.bf16.mxu0 0
    %128 = vmatpush1.bf16.msra.mxu0 0
    %129 = vmatprep.subr.bf16.mxu0 0
    %130 = vmatpush1.bf16.msra.mxu0 0
    %131 = vmatprep.subr.bf16.mxu0 0
    %132 = vmatpush1.bf16.msra.mxu0 0
    %133 = vmatprep.subr.bf16.mxu0 0
    %134 = vmatpush1.bf16.msra.mxu0 0
    %135 = vmatprep.subr.bf16.mxu0 0
    %136 = vmatpush1.bf16.msra.mxu0 0
    %137 = vmatprep.subr.bf16.mxu0 0
    %138 = vmatpush1.bf16.msra.mxu0 0
    %139 = vmatprep.subr.bf16.mxu0 0
    %140 = vmatpush1.bf16.msra.mxu0 0
    %141 = vmatprep.subr.bf16.mxu0 0
    %142 = vmatpush1.bf16.msra.mxu0 0
    %143 = vmatprep.subr.bf16.mxu0 0
    %144 = vmatpush1.bf16.msra.mxu0 0
    %145 = vmatprep.subr.bf16.mxu0 0
    %146 = vmatpush1.bf16.msra.mxu0 0
    %147 = vmatprep.mubr.bf16.mxu0 0
    %148 = vmatmul.mubr.bf16.gmra.mrb[0].mxu0 %v113
    %v149 = vpop.f32.mrb[0].mxu0
    %v150 = vadd.f32 %v99, %v149
    %v151 = vpop.f32.mrb[0].mxu0
    %v152 = vpop.f32.mrb[0].mxu0
    %v153 = vadd.f32 %v99, %v152
    %v154 = vpop.f32.mrb[0].mxu0
    %155 = vdwg.mxu0
    %v156 = vpack.c.bf16 %v153, %v150
    %v157 = vld [vmem:[%s5 + $0x2] sm:$0x1]
    %159 = vrot.lane.b32.xlu0 %v156, 96
    %v160 = vpop.permute.xlu0 %159
    %vm161 = vcmask 64512
    %v163 = vsel %vm161, %v156, 0
    %v166 = vsel %vm161, %v160, 0
    %168 = vmatprep.subr.bf16.mxu0 0
    %169 = vmatpush1.bf16.xpose.msra.mxu0 %v166
    %170 = vmatprep.subr.bf16.mxu0 0
    %171 = vmatpush1.bf16.xpose.msra.mxu0 0
    %172 = vmatprep.subr.bf16.mxu0 0
    %173 = vmatpush1.bf16.xpose.msra.mxu0 0
    %174 = vmatprep.subr.bf16.mxu0 0
    %175 = vmatpush1.bf16.xpose.msra.mxu0 0
    %176 = vmatprep.subr.bf16.mxu0 0
    %177 = vmatpush1.bf16.xpose.msra.mxu0 0
    %178 = vmatprep.subr.bf16.mxu0 0
    %179 = vmatpush1.bf16.xpose.msra.mxu0 0
    %180 = vmatprep.subr.bf16.mxu0 0
    %181 = vmatpush1.bf16.xpose.msra.mxu0 0
    %182 = vmatprep.subr.bf16.mxu0 0
    %183 = vmatpush1.bf16.xpose.msra.mxu0 0
    %184 = vmatprep.subr.bf16.mxu0 0
    %185 = vmatpush1.bf16.xpose.msra.mxu0 0
    %186 = vmatprep.subr.bf16.mxu0 0
    %187 = vmatpush1.bf16.xpose.msra.mxu0 0
    %188 = vmatprep.subr.bf16.mxu0 0
    %189 = vmatpush1.bf16.xpose.msra.mxu0 0
    %190 = vmatprep.subr.bf16.mxu0 0
    %191 = vmatpush1.bf16.xpose.msra.mxu0 0
    %192 = vmatprep.subr.bf16.mxu0 0
    %193 = vmatpush1.bf16.xpose.msra.mxu0 0
    %194 = vmatprep.subr.bf16.mxu0 0
    %195 = vmatpush1.bf16.xpose.msra.mxu0 0
    %196 = vmatprep.subr.bf16.mxu0 0
    %197 = vmatpush1.bf16.xpose.msra.mxu0 0
    %198 = vmatprep.subr.bf16.mxu0 0
    %199 = vmatpush1.bf16.xpose.msra.mxu0 0
    %200 = vmatprep.mubr.bf16.mxu0 0
    %201 = vmatmul.mubr.bf16.gmra.mrb[0].mxu0 %v163
    %v202 = vpop.f32.mrb[0].mxu0
    %v203 = vadd.f32 %v30, %v202
    %v204 = vpop.f32.mrb[0].mxu0
    %v205 = vpop.f32.mrb[0].mxu0
    %v206 = vadd.f32 %v31, %v205
    %v207 = vpop.f32.mrb[0].mxu0
    %208 = vdwg.mxu0
    %vm209 = vcmask 130048
    %v210 = vsel %vm209, %v203, -inf
    %211 = vmax.xlane.f32.xlu0 %v210
    %v212 = vpop.xlane.xlu0 %211
    %v213 = vsel %vm209, %v206, -inf
    %214 = vmax.xlane.f32.xlu0 %v213
    %v215 = vpop.xlane.xlu0 %214
    %v216 = vsub.f32 %v203, %v212
    %v217 = vsub.f32 %v206, %v215
    %v218 = vmul.f32 %v216, 1.442695
    %v219 = vpow.pop %v218
    %v220 = vmul.f32 %v217, 1.442695
    %v221 = vpow.pop %v220
    %v222 = vsel %vm209, %v219, 0.0
    %223 = vadd.xlane.f32.xlu0 %v222
    %v224 = vpop.xlane.xlu0 %223
    %v225 = vsel %vm209, %v221, 0.0
    %226 = vadd.xlane.f32.xlu0 %v225
    %v227 = vpop.xlane.xlu0 %226
    %v228 = vrcp.pop %v224
    %v229 = vrcp.pop %v227
    %v230 = vmul.f32 %v219, %v228
    %v231 = vmul.f32 %v221, %v229
    %v232 = vpack.c.bf16 %v231, %v230
    %233 = vrot.lane.b32.xlu0 %v156, 64
    %v234 = vpop.permute.xlu0 %233
    %v237 = vsel %vm209, %v232, 0
    %239 = vmatprep.subr.bf16.mxu0 0
    %240 = vmatpush1.bf16.msra.mxu0 %v234
    %241 = vmatprep.subr.bf16.mxu0 0
    %242 = vmatpush1.bf16.msra.mxu0 0
    %243 = vmatprep.subr.bf16.mxu0 0
    %244 = vmatpush1.bf16.msra.mxu0 0
    %245 = vmatprep.subr.bf16.mxu0 0
    %246 = vmatpush1.bf16.msra.mxu0 0
    %247 = vmatprep.subr.bf16.mxu0 0
    %248 = vmatpush1.bf16.msra.mxu0 0
    %249 = vmatprep.subr.bf16.mxu0 0
    %250 = vmatpush1.bf16.msra.mxu0 0
    %251 = vmatprep.subr.bf16.mxu0 0
    %252 = vmatpush1.bf16.msra.mxu0 0
    %253 = vmatprep.subr.bf16.mxu0 0
    %254 = vmatpush1.bf16.msra.mxu0 0
    %255 = vmatprep.subr.bf16.mxu0 0
    %256 = vmatpush1.bf16.msra.mxu0 0
    %257 = vmatprep.subr.bf16.mxu0 0
    %258 = vmatpush1.bf16.msra.mxu0 0
    %259 = vmatprep.subr.bf16.mxu0 0
    %260 = vmatpush1.bf16.msra.mxu0 0
    %261 = vmatprep.subr.bf16.mxu0 0
    %262 = vmatpush1.bf16.msra.mxu0 0
    %263 = vmatprep.subr.bf16.mxu0 0
    %264 = vmatpush1.bf16.msra.mxu0 0
    %265 = vmatprep.subr.bf16.mxu0 0
    %266 = vmatpush1.bf16.msra.mxu0 0
    %267 = vmatprep.subr.bf16.mxu0 0
    %268 = vmatpush1.bf16.msra.mxu0 0
    %269 = vmatprep.subr.bf16.mxu0 0
    %270 = vmatpush1.bf16.msra.mxu0 0
    %271 = vmatprep.mubr.bf16.mxu0 0
    %272 = vmatmul.mubr.bf16.gmra.mrb[0].mxu0 %v237
    %v273 = vpop.f32.mrb[0].mxu0
    %v274 = vadd.f32 0.0, %v273
    %v275 = vpop.f32.mrb[0].mxu0
    %v276 = vpop.f32.mrb[0].mxu0
    %v277 = vadd.f32 0.0, %v276
    %v278 = vpop.f32.mrb[0].mxu0
    %279 = vdwg.mxu0
    %v280 = vld [vmem:[%s4] sm:$0xf]
    %v281 = vpack.c.bf16 %v277, %v274
    %282 = vrot.lane.b32.xlu0 %v156, 120
    %v283 = vpop.permute.xlu0 %282
    %284 = vrot.lane.b32.xlu0 %v156, 88
    %v285 = vpop.permute.xlu0 %284
    %v287 = vsel %vm161, %v283, 0
    %v290 = vsel %vm161, %v285, 0
    %292 = vmatprep.subr.bf16.mxu0 0
    %293 = vmatpush1.bf16.xpose.msra.mxu0 %v290
    %294 = vmatprep.subr.bf16.mxu0 0
    %295 = vmatpush1.bf16.xpose.msra.mxu0 0
    %296 = vmatprep.subr.bf16.mxu0 0
    %297 = vmatpush1.bf16.xpose.msra.mxu0 0
    %298 = vmatprep.subr.bf16.mxu0 0
    %299 = vmatpush1.bf16.xpose.msra.mxu0 0
    %300 = vmatprep.subr.bf16.mxu0 0
    %301 = vmatpush1.bf16.xpose.msra.mxu0 0
    %302 = vmatprep.subr.bf16.mxu0 0
    %303 = vmatpush1.bf16.xpose.msra.mxu0 0
    %304 = vmatprep.subr.bf16.mxu0 0
    %305 = vmatpush1.bf16.xpose.msra.mxu0 0
    %306 = vmatprep.subr.bf16.mxu0 0
    %307 = vmatpush1.bf16.xpose.msra.mxu0 0
    %308 = vmatprep.subr.bf16.mxu0 0
    %309 = vmatpush1.bf16.xpose.msra.mxu0 0
    %310 = vmatprep.subr.bf16.mxu0 0
    %311 = vmatpush1.bf16.xpose.msra.mxu0 0
    %312 = vmatprep.subr.bf16.mxu0 0
    %313 = vmatpush1.bf16.xpose.msra.mxu0 0
    %314 = vmatprep.subr.bf16.mxu0 0
    %315 = vmatpush1.bf16.xpose.msra.mxu0 0
    %316 = vmatprep.subr.bf16.mxu0 0
    %317 = vmatpush1.bf16.xpose.msra.mxu0 0
    %318 = vmatprep.subr.bf16.mxu0 0
    %319 = vmatpush1.bf16.xpose.msra.mxu0 0
    %320 = vmatprep.subr.bf16.mxu0 0
    %321 = vmatpush1.bf16.xpose.msra.mxu0 0
    %322 = vmatprep.subr.bf16.mxu0 0
    %323 = vmatpush1.bf16.xpose.msra.mxu0 0
    %324 = vmatprep.mubr.bf16.mxu0 0
    %325 = vmatmul.mubr.bf16.gmra.mrb[0].mxu0 %v287
    %v326 = vpop.f32.mrb[0].mxu0
    %v327 = vadd.f32 %v30, %v326
    %v328 = vpop.f32.mrb[0].mxu0
    %v329 = vpop.f32.mrb[0].mxu0
    %v330 = vadd.f32 %v31, %v329
    %v331 = vpop.f32.mrb[0].mxu0
    %332 = vdwg.mxu0
    %v333 = vsel %vm209, %v327, -inf
    %334 = vmax.xlane.f32.xlu0 %v333
    %v335 = vpop.xlane.xlu0 %334
    %v336 = vsel %vm209, %v330, -inf
    %337 = vmax.xlane.f32.xlu0 %v336
    %v338 = vpop.xlane.xlu0 %337
    %v339 = vsub.f32 %v327, %v335
    %v340 = vsub.f32 %v330, %v338
    %v341 = vmul.f32 %v339, 1.442695
    %v342 = vpow.pop %v341
    %v343 = vmul.f32 %v340, 1.442695
    %v344 = vpow.pop %v343
    %v345 = vsel %vm209, %v342, 0.0
    %346 = vadd.xlane.f32.xlu0 %v345
    %v347 = vpop.xlane.xlu0 %346
    %v348 = vsel %vm209, %v344, 0.0
    %349 = vadd.xlane.f32.xlu0 %v348
    %v350 = vpop.xlane.xlu0 %349
    %v351 = vrcp.pop %v347
    %v352 = vrcp.pop %v350
    %v353 = vmul.f32 %v342, %v351
    %v354 = vmul.f32 %v344, %v352
    %v355 = vpack.c.bf16 %v354, %v353
    %356 = vrot.lane.b32.xlu0 %v156, 56
    %v357 = vpop.permute.xlu0 %356
    %v360 = vsel %vm209, %v355, 0
    %362 = vmatprep.subr.bf16.mxu0 0
    %363 = vmatpush1.bf16.msra.mxu0 %v357
    %364 = vmatprep.subr.bf16.mxu0 0
    %365 = vmatpush1.bf16.msra.mxu0 0
    %366 = vmatprep.subr.bf16.mxu0 0
    %367 = vmatpush1.bf16.msra.mxu0 0
    %368 = vmatprep.subr.bf16.mxu0 0
    %369 = vmatpush1.bf16.msra.mxu0 0
    %370 = vmatprep.subr.bf16.mxu0 0
    %371 = vmatpush1.bf16.msra.mxu0 0
    %372 = vmatprep.subr.bf16.mxu0 0
    %373 = vmatpush1.bf16.msra.mxu0 0
    %374 = vmatprep.subr.bf16.mxu0 0
    %375 = vmatpush1.bf16.msra.mxu0 0
    %376 = vmatprep.subr.bf16.mxu0 0
    %377 = vmatpush1.bf16.msra.mxu0 0
    %378 = vmatprep.subr.bf16.mxu0 0
    %379 = vmatpush1.bf16.msra.mxu0 0
    %380 = vmatprep.subr.bf16.mxu0 0
    %381 = vmatpush1.bf16.msra.mxu0 0
    %382 = vmatprep.subr.bf16.mxu0 0
    %383 = vmatpush1.bf16.msra.mxu0 0
    %384 = vmatprep.subr.bf16.mxu0 0
    %385 = vmatpush1.bf16.msra.mxu0 0
    %386 = vmatprep.subr.bf16.mxu0 0
    %387 = vmatpush1.bf16.msra.mxu0 0
    %388 = vmatprep.subr.bf16.mxu0 0
    %389 = vmatpush1.bf16.msra.mxu0 0
    %390 = vmatprep.subr.bf16.mxu0 0
    %391 = vmatpush1.bf16.msra.mxu0 0
    %392 = vmatprep.subr.bf16.mxu0 0
    %393 = vmatpush1.bf16.msra.mxu0 0
    %394 = vmatprep.mubr.bf16.mxu0 0
    %395 = vmatmul.mubr.bf16.gmra.mrb[0].mxu0 %v360
    %v396 = vpop.f32.mrb[0].mxu0
    %v397 = vadd.f32 0.0, %v396
    %v398 = vpop.f32.mrb[0].mxu0
    %v399 = vpop.f32.mrb[0].mxu0
    %v400 = vadd.f32 0.0, %v399
    %v401 = vpop.f32.mrb[0].mxu0
    %402 = vdwg.mxu0
    %v403 = vld [vmem:[%s4 + $0x4] sm:$0xf]
    %v404 = vpack.c.bf16 %v400, %v397
    %v406 = vunpack.c.l.b16 %v403
    %v407 = vpack.c.b16 %v406, %v406
    %408 = vrot.lane.b32.xlu0 %v407, 32
    %v409 = vpop.permute.xlu0 %408
    %v411 = vsel %vm161, %v404, 0
    %vm413 = vcmask 1043456
    %v415 = vsel %vm413, %v409, 0
    %417 = vmatprep.subr.bf16.mxu0 0
    %418 = vmatpush1.bf16.msra.mxu0 %v415
    %419 = vmatprep.subr.bf16.mxu0 0
    %420 = vmatpush1.bf16.msra.mxu0 0
    %421 = vmatprep.subr.bf16.mxu0 0
    %422 = vmatpush1.bf16.msra.mxu0 0
    %423 = vmatprep.subr.bf16.mxu0 0
    %424 = vmatpush1.bf16.msra.mxu0 0
    %425 = vmatprep.subr.bf16.mxu0 0
    %426 = vmatpush1.bf16.msra.mxu0 0
    %427 = vmatprep.subr.bf16.mxu0 0
    %428 = vmatpush1.bf16.msra.mxu0 0
    %429 = vmatprep.subr.bf16.mxu0 0
    %430 = vmatpush1.bf16.msra.mxu0 0
    %431 = vmatprep.subr.bf16.mxu0 0
    %432 = vmatpush1.bf16.msra.mxu0 0
    %433 = vmatprep.subr.bf16.mxu0 0
    %434 = vmatpush1.bf16.msra.mxu0 0
    %435 = vmatprep.subr.bf16.mxu0 0
    %436 = vmatpush1.bf16.msra.mxu0 0
    %437 = vmatprep.subr.bf16.mxu0 0
    %438 = vmatpush1.bf16.msra.mxu0 0
    %439 = vmatprep.subr.bf16.mxu0 0
    %440 = vmatpush1.bf16.msra.mxu0 0
    %441 = vmatprep.subr.bf16.mxu0 0
    %442 = vmatpush1.bf16.msra.mxu0 0
    %443 = vmatprep.subr.bf16.mxu0 0
    %444 = vmatpush1.bf16.msra.mxu0 0
    %445 = vmatprep.subr.bf16.mxu0 0
    %446 = vmatpush1.bf16.msra.mxu0 0
    %447 = vmatprep.subr.bf16.mxu0 0
    %448 = vmatpush1.bf16.msra.mxu0 0
    %449 = vmatprep.mubr.bf16.mxu0 0
    %450 = vmatmul.mubr.bf16.gmra.mrb[0].mxu0 %v411
    %v451 = vpop.f32.mrb[0].mxu0
    %v452 = vadd.f32 0.0, %v451
    %v453 = vpop.f32.mrb[0].mxu0
    %v454 = vpop.f32.mrb[0].mxu0
    %v455 = vadd.f32 0.0, %v454
    %v456 = vpop.f32.mrb[0].mxu0
    %457 = vdwg.mxu0
    %v459 = vunpack.c.l.b16 %v280
    %v460 = vpack.c.b16 %v459, %v459
    %461 = vrot.lane.b32.xlu0 %v460, 32
    %v462 = vpop.permute.xlu0 %461
    %v464 = vsel %vm161, %v281, 0
    %v467 = vsel %vm413, %v462, 0
    %469 = vmatprep.subr.bf16.mxu0 0
    %470 = vmatpush1.bf16.msra.mxu0 %v467
    %471 = vmatprep.subr.bf16.mxu0 0
    %472 = vmatpush1.bf16.msra.mxu0 0
    %473 = vmatprep.subr.bf16.mxu0 0
    %474 = vmatpush1.bf16.msra.mxu0 0
    %475 = vmatprep.subr.bf16.mxu0 0
    %476 = vmatpush1.bf16.msra.mxu0 0
    %477 = vmatprep.subr.bf16.mxu0 0
    %478 = vmatpush1.bf16.msra.mxu0 0
    %479 = vmatprep.subr.bf16.mxu0 0
    %480 = vmatpush1.bf16.msra.mxu0 0
    %481 = vmatprep.subr.bf16.mxu0 0
    %482 = vmatpush1.bf16.msra.mxu0 0
    %483 = vmatprep.subr.bf16.mxu0 0
    %484 = vmatpush1.bf16.msra.mxu0 0
    %485 = vmatprep.subr.bf16.mxu0 0
    %486 = vmatpush1.bf16.msra.mxu0 0
    %487 = vmatprep.subr.bf16.mxu0 0
    %488 = vmatpush1.bf16.msra.mxu0 0
    %489 = vmatprep.subr.bf16.mxu0 0
    %490 = vmatpush1.bf16.msra.mxu0 0
    %491 = vmatprep.subr.bf16.mxu0 0
    %492 = vmatpush1.bf16.msra.mxu0 0
    %493 = vmatprep.subr.bf16.mxu0 0
    %494 = vmatpush1.bf16.msra.mxu0 0
    %495 = vmatprep.subr.bf16.mxu0 0
    %496 = vmatpush1.bf16.msra.mxu0 0
    %497 = vmatprep.subr.bf16.mxu0 0
    %498 = vmatpush1.bf16.msra.mxu0 0
    %499 = vmatprep.subr.bf16.mxu0 0
    %500 = vmatpush1.bf16.msra.mxu0 0
    %501 = vmatprep.mubr.bf16.mxu0 0
    %502 = vmatmul.mubr.bf16.gmra.mrb[0].mxu0 %v464
    %v503 = vpop.f32.mrb[0].mxu0
    %v504 = vadd.f32 %v452, %v503
    %v505 = vpop.f32.mrb[0].mxu0
    %v506 = vpop.f32.mrb[0].mxu0
    %v507 = vadd.f32 %v455, %v506
    %v508 = vpop.f32.mrb[0].mxu0
    %509 = vdwg.mxu0
    %510 = vrot.lane.b32.xlu0 %v156, 112
    %v511 = vpop.permute.xlu0 %510
    %512 = vrot.lane.b32.xlu0 %v156, 80
    %v513 = vpop.permute.xlu0 %512
    %v515 = vsel %vm161, %v511, 0
    %v518 = vsel %vm161, %v513, 0
    %520 = vmatprep.subr.bf16.mxu0 0
    %521 = vmatpush1.bf16.xpose.msra.mxu0 %v518
    %522 = vmatprep.subr.bf16.mxu0 0
    %523 = vmatpush1.bf16.xpose.msra.mxu0 0
    %524 = vmatprep.subr.bf16.mxu0 0
    %525 = vmatpush1.bf16.xpose.msra.mxu0 0
    %526 = vmatprep.subr.bf16.mxu0 0
    %527 = vmatpush1.bf16.xpose.msra.mxu0 0
    %528 = vmatprep.subr.bf16.mxu0 0
    %529 = vmatpush1.bf16.xpose.msra.mxu0 0
    %530 = vmatprep.subr.bf16.mxu0 0
    %531 = vmatpush1.bf16.xpose.msra.mxu0 0
    %532 = vmatprep.subr.bf16.mxu0 0
    %533 = vmatpush1.bf16.xpose.msra.mxu0 0
    %534 = vmatprep.subr.bf16.mxu0 0
    %535 = vmatpush1.bf16.xpose.msra.mxu0 0
    %536 = vmatprep.subr.bf16.mxu0 0
    %537 = vmatpush1.bf16.xpose.msra.mxu0 0
    %538 = vmatprep.subr.bf16.mxu0 0
    %539 = vmatpush1.bf16.xpose.msra.mxu0 0
    %540 = vmatprep.subr.bf16.mxu0 0
    %541 = vmatpush1.bf16.xpose.msra.mxu0 0
    %542 = vmatprep.subr.bf16.mxu0 0
    %543 = vmatpush1.bf16.xpose.msra.mxu0 0
    %544 = vmatprep.subr.bf16.mxu0 0
    %545 = vmatpush1.bf16.xpose.msra.mxu0 0
    %546 = vmatprep.subr.bf16.mxu0 0
    %547 = vmatpush1.bf16.xpose.msra.mxu0 0
    %548 = vmatprep.subr.bf16.mxu0 0
    %549 = vmatpush1.bf16.xpose.msra.mxu0 0
    %550 = vmatprep.subr.bf16.mxu0 0
    %551 = vmatpush1.bf16.xpose.msra.mxu0 0
    %552 = vmatprep.mubr.bf16.mxu0 0
    %553 = vmatmul.mubr.bf16.gmra.mrb[0].mxu0 %v515
    %v554 = vpop.f32.mrb[0].mxu0
    %v555 = vadd.f32 %v30, %v554
    %v556 = vpop.f32.mrb[0].mxu0
    %v557 = vpop.f32.mrb[0].mxu0
    %v558 = vadd.f32 %v31, %v557
    %v559 = vpop.f32.mrb[0].mxu0
    %560 = vdwg.mxu0
    %v561 = vsel %vm209, %v555, -inf
    %562 = vmax.xlane.f32.xlu0 %v561
    %v563 = vpop.xlane.xlu0 %562
    %v564 = vsel %vm209, %v558, -inf
    %565 = vmax.xlane.f32.xlu0 %v564
    %v566 = vpop.xlane.xlu0 %565
    %v567 = vsub.f32 %v555, %v563
    %v568 = vsub.f32 %v558, %v566
    %v569 = vmul.f32 %v567, 1.442695
    %v570 = vpow.pop %v569
    %v571 = vmul.f32 %v568, 1.442695
    %v572 = vpow.pop %v571
    %v573 = vsel %vm209, %v570, 0.0
    %574 = vadd.xlane.f32.xlu0 %v573
    %v575 = vpop.xlane.xlu0 %574
    %v576 = vsel %vm209, %v572, 0.0
    %577 = vadd.xlane.f32.xlu0 %v576
    %v578 = vpop.xlane.xlu0 %577
    %v579 = vrcp.pop %v575
    %v580 = vrcp.pop %v578
    %v581 = vmul.f32 %v570, %v579
    %v582 = vmul.f32 %v572, %v580
    %v583 = vpack.c.bf16 %v582, %v581
    %584 = vrot.lane.b32.xlu0 %v156, 48
    %v585 = vpop.permute.xlu0 %584
    %v588 = vsel %vm209, %v583, 0
    %590 = vmatprep.subr.bf16.mxu0 0
    %591 = vmatpush1.bf16.msra.mxu0 %v585
    %592 = vmatprep.subr.bf16.mxu0 0
    %593 = vmatpush1.bf16.msra.mxu0 0
    %594 = vmatprep.subr.bf16.mxu0 0
    %595 = vmatpush1.bf16.msra.mxu0 0
    %596 = vmatprep.subr.bf16.mxu0 0
    %597 = vmatpush1.bf16.msra.mxu0 0
    %598 = vmatprep.subr.bf16.mxu0 0
    %599 = vmatpush1.bf16.msra.mxu0 0
    %600 = vmatprep.subr.bf16.mxu0 0
    %601 = vmatpush1.bf16.msra.mxu0 0
    %602 = vmatprep.subr.bf16.mxu0 0
    %603 = vmatpush1.bf16.msra.mxu0 0
    %604 = vmatprep.subr.bf16.mxu0 0
    %605 = vmatpush1.bf16.msra.mxu0 0
    %606 = vmatprep.subr.bf16.mxu0 0
    %607 = vmatpush1.bf16.msra.mxu0 0
    %608 = vmatprep.subr.bf16.mxu0 0
    %609 = vmatpush1.bf16.msra.mxu0 0
    %610 = vmatprep.subr.bf16.mxu0 0
    %611 = vmatpush1.bf16.msra.mxu0 0
    %612 = vmatprep.subr.bf16.mxu0 0
    %613 = vmatpush1.bf16.msra.mxu0 0
    %614 = vmatprep.subr.bf16.mxu0 0
    %615 = vmatpush1.bf16.msra.mxu0 0
    %616 = vmatprep.subr.bf16.mxu0 0
    %617 = vmatpush1.bf16.msra.mxu0 0
    %618 = vmatprep.subr.bf16.mxu0 0
    %619 = vmatpush1.bf16.msra.mxu0 0
    %620 = vmatprep.subr.bf16.mxu0 0
    %621 = vmatpush1.bf16.msra.mxu0 0
    %622 = vmatprep.mubr.bf16.mxu0 0
    %623 = vmatmul.mubr.bf16.gmra.mrb[0].mxu0 %v588
    %v624 = vpop.f32.mrb[0].mxu0
    %v625 = vadd.f32 0.0, %v624
    %v626 = vpop.f32.mrb[0].mxu0
    %v627 = vpop.f32.mrb[0].mxu0
    %v628 = vadd.f32 0.0, %v627
    %v629 = vpop.f32.mrb[0].mxu0
    %630 = vdwg.mxu0
    %v631 = vld [vmem:[%s4 + $0x8] sm:$0xf]
    %v632 = vpack.c.bf16 %v628, %v625
    %v634 = vunpack.c.l.b16 %v631
    %v635 = vpack.c.b16 %v634, %v634
    %636 = vrot.lane.b32.xlu0 %v635, 32
    %v637 = vpop.permute.xlu0 %636
    %v639 = vsel %vm161, %v632, 0
    %v642 = vsel %vm413, %v637, 0
    %644 = vmatprep.subr.bf16.mxu0 0
    %645 = vmatpush1.bf16.msra.mxu0 %v642
    %646 = vmatprep.subr.bf16.mxu0 0
    %647 = vmatpush1.bf16.msra.mxu0 0
    %648 = vmatprep.subr.bf16.mxu0 0
    %649 = vmatpush1.bf16.msra.mxu0 0
    %650 = vmatprep.subr.bf16.mxu0 0
    %651 = vmatpush1.bf16.msra.mxu0 0
    %652 = vmatprep.subr.bf16.mxu0 0
    %653 = vmatpush1.bf16.msra.mxu0 0
    %654 = vmatprep.subr.bf16.mxu0 0
    %655 = vmatpush1.bf16.msra.mxu0 0
    %656 = vmatprep.subr.bf16.mxu0 0
    %657 = vmatpush1.bf16.msra.mxu0 0
    %658 = vmatprep.subr.bf16.mxu0 0
    %659 = vmatpush1.bf16.msra.mxu0 0
    %660 = vmatprep.subr.bf16.mxu0 0
    %661 = vmatpush1.bf16.msra.mxu0 0
    %662 = vmatprep.subr.bf16.mxu0 0
    %663 = vmatpush1.bf16.msra.mxu0 0
    %664 = vmatprep.subr.bf16.mxu0 0
    %665 = vmatpush1.bf16.msra.mxu0 0
    %666 = vmatprep.subr.bf16.mxu0 0
    %667 = vmatpush1.bf16.msra.mxu0 0
    %668 = vmatprep.subr.bf16.mxu0 0
    %669 = vmatpush1.bf16.msra.mxu0 0
    %670 = vmatprep.subr.bf16.mxu0 0
    %671 = vmatpush1.bf16.msra.mxu0 0
    %672 = vmatprep.subr.bf16.mxu0 0
    %673 = vmatpush1.bf16.msra.mxu0 0
    %674 = vmatprep.subr.bf16.mxu0 0
    %675 = vmatpush1.bf16.msra.mxu0 0
    %676 = vmatprep.mubr.bf16.mxu0 0
    %677 = vmatmul.mubr.bf16.gmra.mrb[0].mxu0 %v639
    %v678 = vpop.f32.mrb[0].mxu0
    %v679 = vadd.f32 0.0, %v678
    %v680 = vpop.f32.mrb[0].mxu0
    %v681 = vpop.f32.mrb[0].mxu0
    %v682 = vadd.f32 0.0, %v681
    %v683 = vpop.f32.mrb[0].mxu0
    %684 = vdwg.mxu0
    %v685 = vadd.f32 %v504, %v679
    %v686 = vadd.f32 %v507, %v682
    %687 = vrot.lane.b32.xlu0 %v156, 104
    %v688 = vpop.permute.xlu0 %687
    %689 = vrot.lane.b32.xlu0 %v156, 72
    %v690 = vpop.permute.xlu0 %689
    %v692 = vsel %vm161, %v688, 0
    %v695 = vsel %vm161, %v690, 0
    %697 = vmatprep.subr.bf16.mxu0 0
    %698 = vmatpush1.bf16.xpose.msra.mxu0 %v695
    %699 = vmatprep.subr.bf16.mxu0 0
    %700 = vmatpush1.bf16.xpose.msra.mxu0 0
    %701 = vmatprep.subr.bf16.mxu0 0
    %702 = vmatpush1.bf16.xpose.msra.mxu0 0
    %703 = vmatprep.subr.bf16.mxu0 0
    %704 = vmatpush1.bf16.xpose.msra.mxu0 0
    %705 = vmatprep.subr.bf16.mxu0 0
    %706 = vmatpush1.bf16.xpose.msra.mxu0 0
    %707 = vmatprep.subr.bf16.mxu0 0
    %708 = vmatpush1.bf16.xpose.msra.mxu0 0
    %709 = vmatprep.subr.bf16.mxu0 0
    %710 = vmatpush1.bf16.xpose.msra.mxu0 0
    %711 = vmatprep.subr.bf16.mxu0 0
    %712 = vmatpush1.bf16.xpose.msra.mxu0 0
    %713 = vmatprep.subr.bf16.mxu0 0
    %714 = vmatpush1.bf16.xpose.msra.mxu0 0
    %715 = vmatprep.subr.bf16.mxu0 0
    %716 = vmatpush1.bf16.xpose.msra.mxu0 0
    %717 = vmatprep.subr.bf16.mxu0 0
    %718 = vmatpush1.bf16.xpose.msra.mxu0 0
    %719 = vmatprep.subr.bf16.mxu0 0
    %720 = vmatpush1.bf16.xpose.msra.mxu0 0
    %721 = vmatprep.subr.bf16.mxu0 0
    %722 = vmatpush1.bf16.xpose.msra.mxu0 0
    %723 = vmatprep.subr.bf16.mxu0 0
    %724 = vmatpush1.bf16.xpose.msra.mxu0 0
    %725 = vmatprep.subr.bf16.mxu0 0
    %726 = vmatpush1.bf16.xpose.msra.mxu0 0
    %727 = vmatprep.subr.bf16.mxu0 0
    %728 = vmatpush1.bf16.xpose.msra.mxu0 0
    %729 = vmatprep.mubr.bf16.mxu0 0
    %730 = vmatmul.mubr.bf16.gmra.mrb[0].mxu0 %v692
    %v731 = vpop.f32.mrb[0].mxu0
    %v732 = vadd.f32 %v30, %v731
    %v733 = vpop.f32.mrb[0].mxu0
    %v734 = vpop.f32.mrb[0].mxu0
    %v735 = vadd.f32 %v31, %v734
    %v736 = vpop.f32.mrb[0].mxu0
    %737 = vdwg.mxu0
    %v738 = vsel %vm209, %v732, -inf
    %739 = vmax.xlane.f32.xlu0 %v738
    %v740 = vpop.xlane.xlu0 %739
    %v741 = vsel %vm209, %v735, -inf
    %742 = vmax.xlane.f32.xlu0 %v741
    %v743 = vpop.xlane.xlu0 %742
    %v744 = vsub.f32 %v732, %v740
    %v745 = vsub.f32 %v735, %v743
    %v746 = vmul.f32 %v744, 1.442695
    %v747 = vpow.pop %v746
    %v748 = vmul.f32 %v745, 1.442695
    %v749 = vpow.pop %v748
    %v750 = vsel %vm209, %v747, 0.0
    %751 = vadd.xlane.f32.xlu0 %v750
    %v752 = vpop.xlane.xlu0 %751
    %v753 = vsel %vm209, %v749, 0.0
    %754 = vadd.xlane.f32.xlu0 %v753
    %v755 = vpop.xlane.xlu0 %754
    %v756 = vrcp.pop %v752
    %v757 = vrcp.pop %v755
    %v758 = vmul.f32 %v747, %v756
    %v759 = vmul.f32 %v749, %v757
    %v760 = vpack.c.bf16 %v759, %v758
    %761 = vrot.lane.b32.xlu0 %v156, 40
    %v762 = vpop.permute.xlu0 %761
    %v765 = vsel %vm209, %v760, 0
    %767 = vmatprep.subr.bf16.mxu0 0
    %768 = vmatpush1.bf16.msra.mxu0 %v762
    %769 = vmatprep.subr.bf16.mxu0 0
    %770 = vmatpush1.bf16.msra.mxu0 0
    %771 = vmatprep.subr.bf16.mxu0 0
    %772 = vmatpush1.bf16.msra.mxu0 0
    %773 = vmatprep.subr.bf16.mxu0 0
    %774 = vmatpush1.bf16.msra.mxu0 0
    %775 = vmatprep.subr.bf16.mxu0 0
    %776 = vmatpush1.bf16.msra.mxu0 0
    %777 = vmatprep.subr.bf16.mxu0 0
    %778 = vmatpush1.bf16.msra.mxu0 0
    %779 = vmatprep.subr.bf16.mxu0 0
    %780 = vmatpush1.bf16.msra.mxu0 0
    %781 = vmatprep.subr.bf16.mxu0 0
    %782 = vmatpush1.bf16.msra.mxu0 0
    %783 = vmatprep.subr.bf16.mxu0 0
    %784 = vmatpush1.bf16.msra.mxu0 0
    %785 = vmatprep.subr.bf16.mxu0 0
    %786 = vmatpush1.bf16.msra.mxu0 0
    %787 = vmatprep.subr.bf16.mxu0 0
    %788 = vmatpush1.bf16.msra.mxu0 0
    %789 = vmatprep.subr.bf16.mxu0 0
    %790 = vmatpush1.bf16.msra.mxu0 0
    %791 = vmatprep.subr.bf16.mxu0 0
    %792 = vmatpush1.bf16.msra.mxu0 0
    %793 = vmatprep.subr.bf16.mxu0 0
    %794 = vmatpush1.bf16.msra.mxu0 0
    %795 = vmatprep.subr.bf16.mxu0 0
    %796 = vmatpush1.bf16.msra.mxu0 0
    %797 = vmatprep.subr.bf16.mxu0 0
    %798 = vmatpush1.bf16.msra.mxu0 0
    %799 = vmatprep.mubr.bf16.mxu0 0
    %800 = vmatmul.mubr.bf16.gmra.mrb[0].mxu0 %v765
    %v801 = vpop.f32.mrb[0].mxu0
    %v802 = vadd.f32 0.0, %v801
    %v803 = vpop.f32.mrb[0].mxu0
    %v804 = vpop.f32.mrb[0].mxu0
    %v805 = vadd.f32 0.0, %v804
    %v806 = vpop.f32.mrb[0].mxu0
    %807 = vdwg.mxu0
    %v808 = vpack.c.bf16 %v805, %v802
    %v809 = vpack.c.b16 %v107, %v107
    %810 = vrot.lane.b32.xlu0 %v809, 32
    %v811 = vpop.permute.xlu0 %810
    %v813 = vsel %vm161, %v808, 0
    %v816 = vsel %vm413, %v811, 0
    %818 = vmatprep.subr.bf16.mxu0 0
    %819 = vmatpush1.bf16.msra.mxu0 %v816
    %820 = vmatprep.subr.bf16.mxu0 0
    %821 = vmatpush1.bf16.msra.mxu0 0
    %822 = vmatprep.subr.bf16.mxu0 0
    %823 = vmatpush1.bf16.msra.mxu0 0
    %824 = vmatprep.subr.bf16.mxu0 0
    %825 = vmatpush1.bf16.msra.mxu0 0
    %826 = vmatprep.subr.bf16.mxu0 0
    %827 = vmatpush1.bf16.msra.mxu0 0
    %828 = vmatprep.subr.bf16.mxu0 0
    %829 = vmatpush1.bf16.msra.mxu0 0
    %830 = vmatprep.subr.bf16.mxu0 0
    %831 = vmatpush1.bf16.msra.mxu0 0
    %832 = vmatprep.subr.bf16.mxu0 0
    %833 = vmatpush1.bf16.msra.mxu0 0
    %834 = vmatprep.subr.bf16.mxu0 0
    %835 = vmatpush1.bf16.msra.mxu0 0
    %836 = vmatprep.subr.bf16.mxu0 0
    %837 = vmatpush1.bf16.msra.mxu0 0
    %838 = vmatprep.subr.bf16.mxu0 0
    %839 = vmatpush1.bf16.msra.mxu0 0
    %840 = vmatprep.subr.bf16.mxu0 0
    %841 = vmatpush1.bf16.msra.mxu0 0
    %842 = vmatprep.subr.bf16.mxu0 0
    %843 = vmatpush1.bf16.msra.mxu0 0
    %844 = vmatprep.subr.bf16.mxu0 0
    %845 = vmatpush1.bf16.msra.mxu0 0
    %846 = vmatprep.subr.bf16.mxu0 0
    %847 = vmatpush1.bf16.msra.mxu0 0
    %848 = vmatprep.subr.bf16.mxu0 0
    %849 = vmatpush1.bf16.msra.mxu0 0
    %850 = vmatprep.mubr.bf16.mxu0 0
    %851 = vmatmul.mubr.bf16.gmra.mrb[0].mxu0 %v813
    %v852 = vpop.f32.mrb[0].mxu0
    %v853 = vadd.f32 0.0, %v852
    %v854 = vpop.f32.mrb[0].mxu0
    %v855 = vpop.f32.mrb[0].mxu0
    %v856 = vadd.f32 0.0, %v855
    %v857 = vpop.f32.mrb[0].mxu0
    %858 = vdwg.mxu0
    %v859 = vadd.f32 %v685, %v853
    %v860 = vadd.f32 %v686, %v856
    %v861 = vlaneseq
    %v862 = vshrl.u32 %v861, 7
    %v863 = vsub.s32 0, %v862
    %v864 = vrot.slane %v157, %v863
    %v865 = vadd.f32 %v859, %v864
    %v866 = vadd.f32 %v860, %v864
    %v867 = vadd.f32 %v25, %v865
    %v868 = vadd.f32 %v26, %v866
    %v869 = vld [vmem:[%s5 + $0x8] sm:$0x1]
    %v870 = vld [vmem:[%s5 + $0x9] sm:$0x1]
    %v871 = vsel %vm36, %v867, 0.0
    %872 = vadd.xlane.f32.xlu0 %v871
    %v873 = vpop.xlane.xlu0 %872
    %v874 = vsel %vm36, %v868, 0.0
    %875 = vadd.xlane.f32.xlu0 %v874
    %v876 = vpop.xlane.xlu0 %875
    %v877 = vmul.f32 %v873, %v43
    %v878 = vmul.f32 %v876, %v43
    %v879 = vsub.f32 %v867, %v877
    %v880 = vsub.f32 %v868, %v878
    %v881 = vmul.f32 %v879, %v879
    %v882 = vmul.f32 %v880, %v880
    %v883 = vsel %vm36, %v881, 0.0
    %884 = vadd.xlane.f32.xlu0 %v883
    %v885 = vpop.xlane.xlu0 %884
    %v886 = vsel %vm36, %v882, 0.0
    %887 = vadd.xlane.f32.xlu0 %v886
    %v888 = vpop.xlane.xlu0 %887
    %v889 = vmul.f32 %v885, %v56
    %v890 = vmul.f32 %v888, %v56
    %v891 = vlaneseq
    %v892 = vshrl.u32 %v891, 7
    %v893 = vsub.s32 0, %v892
    %v894 = vrot.slane %v869, %v893
    %v895 = vmul.f32 %v894, %v879
    %v896 = vmul.f32 %v894, %v880
    %v897 = vlaneseq
    %v898 = vshrl.u32 %v897, 7
    %v899 = vsub.s32 0, %v898
    %v900 = vrot.slane %v870, %v899
    %v901 = vrcp.pop %v900
    %v902 = vmul.f32 %v895, %v901
    %v903 = vmul.f32 %v896, %v901
    %v904 = vrsqrt.pop %v889
    %v905 = vmul.f32 %v889, %v904
    %vm906 = vcmp.eq.f32.partialorder %v889, inf
    %v907 = vsel %vm906, %v889, %v905
    %vm908 = vcmp.eq.f32.partialorder %v889, 0.0
    %v909 = vand.u32 %v889, 2147483648
    %v910 = vsel %vm908, %v909, %v907
    %v911 = vrsqrt.pop %v890
    %v912 = vmul.f32 %v890, %v911
    %vm913 = vcmp.eq.f32.partialorder %v890, inf
    %v914 = vsel %vm913, %v890, %v912
    %vm915 = vcmp.eq.f32.partialorder %v890, 0.0
    %v916 = vand.u32 %v890, 2147483648
    %v917 = vsel %vm915, %v916, %v914
    %v918 = vadd.f32 %v902, %v910
    %v919 = vadd.f32 %v903, %v917
    %v920 = vadd.f32 %v918, 1e-06
    %v921 = vadd.f32 %v919, 1e-06
    %v922 = vpack.c.bf16 %v921, %v920
    %v923 = vld [vmem:[%s4 + $0x10] sm:$0xf]
    %v924 = vld [vmem:[%s4 + $0x14] sm:$0xf]
    %v925 = vld [vmem:[%s4 + $0x18] sm:$0xf]
    %v926 = vld [vmem:[%s4 + $0x1c] sm:$0xf]
    %v927 = vld [vmem:[%s5 + $0x1] sm:$0x1]
    %v928 = vlaneseq
    %v929 = vshrl.u32 %v928, 7
    %v930 = vsub.s32 0, %v929
    %v931 = vrot.slane %v927, %v930
    %v936 = vunpack.c.l.b16 %v923
    %v937 = vunpack.c.l.b16 %v924
    %v938 = vunpack.c.l.b16 %v925
    %v939 = vunpack.c.l.b16 %v926
    %v940 = vpack.c.b16 %v937, %v936
    %v941 = vpack.c.b16 %v939, %v938
    %v945 = vsel %vm36, %v922, 0
    %947 = vmatprep.subr.bf16.mxu0 0
    %948 = vmatpush1.bf16.msra.mxu0 %v940
    %949 = vmatprep.subr.bf16.mxu0 0
    %950 = vmatpush1.bf16.msra.mxu0 %v941
    %951 = vmatprep.subr.bf16.mxu0 0
    %952 = vmatpush1.bf16.msra.mxu0 0
    %953 = vmatprep.subr.bf16.mxu0 0
    %954 = vmatpush1.bf16.msra.mxu0 0
    %955 = vmatprep.subr.bf16.mxu0 0
    %956 = vmatpush1.bf16.msra.mxu0 0
    %957 = vmatprep.subr.bf16.mxu0 0
    %958 = vmatpush1.bf16.msra.mxu0 0
    %959 = vmatprep.subr.bf16.mxu0 0
    %960 = vmatpush1.bf16.msra.mxu0 0
    %961 = vmatprep.subr.bf16.mxu0 0
    %962 = vmatpush1.bf16.msra.mxu0 0
    %963 = vmatprep.subr.bf16.mxu0 0
    %964 = vmatpush1.bf16.msra.mxu0 0
    %965 = vmatprep.subr.bf16.mxu0 0
    %966 = vmatpush1.bf16.msra.mxu0 0
    %967 = vmatprep.subr.bf16.mxu0 0
    %968 = vmatpush1.bf16.msra.mxu0 0
    %969 = vmatprep.subr.bf16.mxu0 0
    %970 = vmatpush1.bf16.msra.mxu0 0
    %971 = vmatprep.subr.bf16.mxu0 0
    %972 = vmatpush1.bf16.msra.mxu0 0
    %973 = vmatprep.subr.bf16.mxu0 0
    %974 = vmatpush1.bf16.msra.mxu0 0
    %975 = vmatprep.subr.bf16.mxu0 0
    %976 = vmatpush1.bf16.msra.mxu0 0
    %977 = vmatprep.subr.bf16.mxu0 0
    %978 = vmatpush1.bf16.msra.mxu0 0
    %979 = vmatprep.mubr.bf16.mxu0 0
    %980 = vmatmul.mubr.bf16.gmra.mrb[0].mxu0 %v945
    %v981 = vpop.f32.mrb[0].mxu0
    %v982 = vadd.f32 %v931, %v981
    %v983 = vpop.f32.mrb[0].mxu0
    %v984 = vpop.f32.mrb[0].mxu0
    %v985 = vadd.f32 %v931, %v984
    %v986 = vpop.f32.mrb[0].mxu0
    %987 = vdwg.mxu0
    %v988 = vpack.c.bf16 %v985, %v982
    %v990 = vsel %vm36, %v29, 0
    %992 = vmatprep.subr.bf16.mxu0 0
    %993 = vmatpush1.bf16.msra.mxu0 %v940
    %994 = vmatprep.subr.bf16.mxu0 0
    %995 = vmatpush1.bf16.msra.mxu0 %v941
    %996 = vmatprep.subr.bf16.mxu0 0
    %997 = vmatpush1.bf16.msra.mxu0 0
    %998 = vmatprep.subr.bf16.mxu0 0
    %999 = vmatpush1.bf16.msra.mxu0 0
    %1000 = vmatprep.subr.bf16.mxu0 0
    %1001 = vmatpush1.bf16.msra.mxu0 0
    %1002 = vmatprep.subr.bf16.mxu0 0
    %1003 = vmatpush1.bf16.msra.mxu0 0
    %1004 = vmatprep.subr.bf16.mxu0 0
    %1005 = vmatpush1.bf16.msra.mxu0 0
    %1006 = vmatprep.subr.bf16.mxu0 0
    %1007 = vmatpush1.bf16.msra.mxu0 0
    %1008 = vmatprep.subr.bf16.mxu0 0
    %1009 = vmatpush1.bf16.msra.mxu0 0
    %1010 = vmatprep.subr.bf16.mxu0 0
    %1011 = vmatpush1.bf16.msra.mxu0 0
    %1012 = vmatprep.subr.bf16.mxu0 0
    %1013 = vmatpush1.bf16.msra.mxu0 0
    %1014 = vmatprep.subr.bf16.mxu0 0
    %1015 = vmatpush1.bf16.msra.mxu0 0
    %1016 = vmatprep.subr.bf16.mxu0 0
    %1017 = vmatpush1.bf16.msra.mxu0 0
    %1018 = vmatprep.subr.bf16.mxu0 0
    %1019 = vmatpush1.bf16.msra.mxu0 0
    %1020 = vmatprep.subr.bf16.mxu0 0
    %1021 = vmatpush1.bf16.msra.mxu0 0
    %1022 = vmatprep.subr.bf16.mxu0 0
    %1023 = vmatpush1.bf16.msra.mxu0 0
    %1024 = vmatprep.mubr.bf16.mxu0 0
    %1025 = vmatmul.mubr.bf16.gmra.mrb[0].mxu0 %v990
    %v1026 = vpop.f32.mrb[0].mxu0
    %v1027 = vadd.f32 %v931, %v1026
    %v1028 = vpop.f32.mrb[0].mxu0
    %v1029 = vpop.f32.mrb[0].mxu0
    %v1030 = vadd.f32 %v931, %v1029
    %v1031 = vpop.f32.mrb[0].mxu0
    %1032 = vdwg.mxu0
    %v1033 = vpack.c.bf16 %v1030, %v1027
    %v1034 = vld [vmem:[%s5 + $0x3] sm:$0x1]
    %1036 = vrot.lane.b32.xlu0 %v1033, 96
    %v1037 = vpop.permute.xlu0 %1036
    %v1039 = vsel %vm161, %v988, 0
    %v1042 = vsel %vm161, %v1037, 0
    %1044 = vmatprep.subr.bf16.mxu0 0
    %1045 = vmatpush1.bf16.xpose.msra.mxu0 %v1042
    %1046 = vmatprep.subr.bf16.mxu0 0
    %1047 = vmatpush1.bf16.xpose.msra.mxu0 0
    %1048 = vmatprep.subr.bf16.mxu0 0
    %1049 = vmatpush1.bf16.xpose.msra.mxu0 0
    %1050 = vmatprep.subr.bf16.mxu0 0
    %1051 = vmatpush1.bf16.xpose.msra.mxu0 0
    %1052 = vmatprep.subr.bf16.mxu0 0
    %1053 = vmatpush1.bf16.xpose.msra.mxu0 0
    %1054 = vmatprep.subr.bf16.mxu0 0
    %1055 = vmatpush1.bf16.xpose.msra.mxu0 0
    %1056 = vmatprep.subr.bf16.mxu0 0
    %1057 = vmatpush1.bf16.xpose.msra.mxu0 0
    %1058 = vmatprep.subr.bf16.mxu0 0
    %1059 = vmatpush1.bf16.xpose.msra.mxu0 0
    %1060 = vmatprep.subr.bf16.mxu0 0
    %1061 = vmatpush1.bf16.xpose.msra.mxu0 0
    %1062 = vmatprep.subr.bf16.mxu0 0
    %1063 = vmatpush1.bf16.xpose.msra.mxu0 0
    %1064 = vmatprep.subr.bf16.mxu0 0
    %1065 = vmatpush1.bf16.xpose.msra.mxu0 0
    %1066 = vmatprep.subr.bf16.mxu0 0
    %1067 = vmatpush1.bf16.xpose.msra.mxu0 0
    %1068 = vmatprep.subr.bf16.mxu0 0
    %1069 = vmatpush1.bf16.xpose.msra.mxu0 0
    %1070 = vmatprep.subr.bf16.mxu0 0
    %1071 = vmatpush1.bf16.xpose.msra.mxu0 0
    %1072 = vmatprep.subr.bf16.mxu0 0
    %1073 = vmatpush1.bf16.xpose.msra.mxu0 0
    %1074 = vmatprep.subr.bf16.mxu0 0
    %1075 = vmatpush1.bf16.xpose.msra.mxu0 0
    %1076 = vmatprep.mubr.bf16.mxu0 0
    %1077 = vmatmul.mubr.bf16.gmra.mrb[0].mxu0 %v1039
    %v1078 = vpop.f32.mrb[0].mxu0
    %v1079 = vadd.f32 %v32, %v1078
    %v1080 = vpop.f32.mrb[0].mxu0
    %v1081 = vpop.f32.mrb[0].mxu0
    %v1082 = vadd.f32 %v33, %v1081
    %v1083 = vpop.f32.mrb[0].mxu0
    %1084 = vdwg.mxu0
    %v1085 = vsel %vm209, %v1079, -inf
    %1086 = vmax.xlane.f32.xlu0 %v1085
    %v1087 = vpop.xlane.xlu0 %1086
    %v1088 = vsel %vm209, %v1082, -inf
    %1089 = vmax.xlane.f32.xlu0 %v1088
    %v1090 = vpop.xlane.xlu0 %1089
    %v1091 = vsub.f32 %v1079, %v1087
    %v1092 = vsub.f32 %v1082, %v1090
    %v1093 = vmul.f32 %v1091, 1.442695
    %v1094 = vpow.pop %v1093
    %v1095 = vmul.f32 %v1092, 1.442695
    %v1096 = vpow.pop %v1095
    %v1097 = vsel %vm209, %v1094, 0.0
    %1098 = vadd.xlane.f32.xlu0 %v1097
    %v1099 = vpop.xlane.xlu0 %1098
    %v1100 = vsel %vm209, %v1096, 0.0
    %1101 = vadd.xlane.f32.xlu0 %v1100
    %v1102 = vpop.xlane.xlu0 %1101
    %v1103 = vrcp.pop %v1099
    %v1104 = vrcp.pop %v1102
    %v1105 = vmul.f32 %v1094, %v1103
    %v1106 = vmul.f32 %v1096, %v1104
    %v1107 = vpack.c.bf16 %v1106, %v1105
    %1108 = vrot.lane.b32.xlu0 %v1033, 64
    %v1109 = vpop.permute.xlu0 %1108
    %v1112 = vsel %vm209, %v1107, 0
    %1114 = vmatprep.subr.bf16.mxu0 0
    %1115 = vmatpush1.bf16.msra.mxu0 %v1109
    %1116 = vmatprep.subr.bf16.mxu0 0
    %1117 = vmatpush1.bf16.msra.mxu0 0
    %1118 = vmatprep.subr.bf16.mxu0 0
    %1119 = vmatpush1.bf16.msra.mxu0 0
    %1120 = vmatprep.subr.bf16.mxu0 0
    %1121 = vmatpush1.bf16.msra.mxu0 0
    %1122 = vmatprep.subr.bf16.mxu0 0
    %1123 = vmatpush1.bf16.msra.mxu0 0
    %1124 = vmatprep.subr.bf16.mxu0 0
    %1125 = vmatpush1.bf16.msra.mxu0 0
    %1126 = vmatprep.subr.bf16.mxu0 0
    %1127 = vmatpush1.bf16.msra.mxu0 0
    %1128 = vmatprep.subr.bf16.mxu0 0
    %1129 = vmatpush1.bf16.msra.mxu0 0
    %1130 = vmatprep.subr.bf16.mxu0 0
    %1131 = vmatpush1.bf16.msra.mxu0 0
    %1132 = vmatprep.subr.bf16.mxu0 0
    %1133 = vmatpush1.bf16.msra.mxu0 0
    %1134 = vmatprep.subr.bf16.mxu0 0
    %1135 = vmatpush1.bf16.msra.mxu0 0
    %1136 = vmatprep.subr.bf16.mxu0 0
    %1137 = vmatpush1.bf16.msra.mxu0 0
    %1138 = vmatprep.subr.bf16.mxu0 0
    %1139 = vmatpush1.bf16.msra.mxu0 0
    %1140 = vmatprep.subr.bf16.mxu0 0
    %1141 = vmatpush1.bf16.msra.mxu0 0
    %1142 = vmatprep.subr.bf16.mxu0 0
    %1143 = vmatpush1.bf16.msra.mxu0 0
    %1144 = vmatprep.subr.bf16.mxu0 0
    %1145 = vmatpush1.bf16.msra.mxu0 0
    %1146 = vmatprep.mubr.bf16.mxu0 0
    %1147 = vmatmul.mubr.bf16.gmra.mrb[0].mxu0 %v1112
    %v1148 = vpop.f32.mrb[0].mxu0
    %v1149 = vadd.f32 0.0, %v1148
    %v1150 = vpop.f32.mrb[0].mxu0
    %v1151 = vpop.f32.mrb[0].mxu0
    %v1152 = vadd.f32 0.0, %v1151
    %v1153 = vpop.f32.mrb[0].mxu0
    %1154 = vdwg.mxu0
    %v1155 = vld [vmem:[%s4 + $0x10] sm:$0xf]
    %v1156 = vpack.c.bf16 %v1152, %v1149
    %1158 = vrot.lane.b32.xlu0 %v988, 120
    %v1159 = vpop.permute.xlu0 %1158
    %1160 = vrot.lane.b32.xlu0 %v1033, 88
    %v1161 = vpop.permute.xlu0 %1160
    %v1163 = vsel %vm161, %v1159, 0
    %v1166 = vsel %vm161, %v1161, 0
    %1168 = vmatprep.subr.bf16.mxu0 0
    %1169 = vmatpush1.bf16.xpose.msra.mxu0 %v1166
    %1170 = vmatprep.subr.bf16.mxu0 0
    %1171 = vmatpush1.bf16.xpose.msra.mxu0 0
    %1172 = vmatprep.subr.bf16.mxu0 0
    %1173 = vmatpush1.bf16.xpose.msra.mxu0 0
    %1174 = vmatprep.subr.bf16.mxu0 0
    %1175 = vmatpush1.bf16.xpose.msra.mxu0 0
    %1176 = vmatprep.subr.bf16.mxu0 0
    %1177 = vmatpush1.bf16.xpose.msra.mxu0 0
    %1178 = vmatprep.subr.bf16.mxu0 0
    %1179 = vmatpush1.bf16.xpose.msra.mxu0 0
    %1180 = vmatprep.subr.bf16.mxu0 0
    %1181 = vmatpush1.bf16.xpose.msra.mxu0 0
    %1182 = vmatprep.subr.bf16.mxu0 0
    %1183 = vmatpush1.bf16.xpose.msra.mxu0 0
    %1184 = vmatprep.subr.bf16.mxu0 0
    %1185 = vmatpush1.bf16.xpose.msra.mxu0 0
    %1186 = vmatprep.subr.bf16.mxu0 0
    %1187 = vmatpush1.bf16.xpose.msra.mxu0 0
    %1188 = vmatprep.subr.bf16.mxu0 0
    %1189 = vmatpush1.bf16.xpose.msra.mxu0 0
    %1190 = vmatprep.subr.bf16.mxu0 0
    %1191 = vmatpush1.bf16.xpose.msra.mxu0 0
    %1192 = vmatprep.subr.bf16.mxu0 0
    %1193 = vmatpush1.bf16.xpose.msra.mxu0 0
    %1194 = vmatprep.subr.bf16.mxu0 0
    %1195 = vmatpush1.bf16.xpose.msra.mxu0 0
    %1196 = vmatprep.subr.bf16.mxu0 0
    %1197 = vmatpush1.bf16.xpose.msra.mxu0 0
    %1198 = vmatprep.subr.bf16.mxu0 0
    %1199 = vmatpush1.bf16.xpose.msra.mxu0 0
    %1200 = vmatprep.mubr.bf16.mxu0 0
    %1201 = vmatmul.mubr.bf16.gmra.mrb[0].mxu0 %v1163
    %v1202 = vpop.f32.mrb[0].mxu0
    %v1203 = vadd.f32 %v32, %v1202
    %v1204 = vpop.f32.mrb[0].mxu0
    %v1205 = vpop.f32.mrb[0].mxu0
    %v1206 = vadd.f32 %v33, %v1205
    %v1207 = vpop.f32.mrb[0].mxu0
    %1208 = vdwg.mxu0
    %v1209 = vsel %vm209, %v1203, -inf
    %1210 = vmax.xlane.f32.xlu0 %v1209
    %v1211 = vpop.xlane.xlu0 %1210
    %v1212 = vsel %vm209, %v1206, -inf
    %1213 = vmax.xlane.f32.xlu0 %v1212
    %v1214 = vpop.xlane.xlu0 %1213
    %v1215 = vsub.f32 %v1203, %v1211
    %v1216 = vsub.f32 %v1206, %v1214
    %v1217 = vmul.f32 %v1215, 1.442695
    %v1218 = vpow.pop %v1217
    %v1219 = vmul.f32 %v1216, 1.442695
    %v1220 = vpow.pop %v1219
    %v1221 = vsel %vm209, %v1218, 0.0
    %1222 = vadd.xlane.f32.xlu0 %v1221
    %v1223 = vpop.xlane.xlu0 %1222
    %v1224 = vsel %vm209, %v1220, 0.0
    %1225 = vadd.xlane.f32.xlu0 %v1224
    %v1226 = vpop.xlane.xlu0 %1225
    %v1227 = vrcp.pop %v1223
    %v1228 = vrcp.pop %v1226
    %v1229 = vmul.f32 %v1218, %v1227
    %v1230 = vmul.f32 %v1220, %v1228
    %v1231 = vpack.c.bf16 %v1230, %v1229
    %1232 = vrot.lane.b32.xlu0 %v1033, 56
    %v1233 = vpop.permute.xlu0 %1232
    %v1236 = vsel %vm209, %v1231, 0
    %1238 = vmatprep.subr.bf16.mxu0 0
    %1239 = vmatpush1.bf16.msra.mxu0 %v1233
    %1240 = vmatprep.subr.bf16.mxu0 0
    %1241 = vmatpush1.bf16.msra.mxu0 0
    %1242 = vmatprep.subr.bf16.mxu0 0
    %1243 = vmatpush1.bf16.msra.mxu0 0
    %1244 = vmatprep.subr.bf16.mxu0 0
    %1245 = vmatpush1.bf16.msra.mxu0 0
    %1246 = vmatprep.subr.bf16.mxu0 0
    %1247 = vmatpush1.bf16.msra.mxu0 0
    %1248 = vmatprep.subr.bf16.mxu0 0
    %1249 = vmatpush1.bf16.msra.mxu0 0
    %1250 = vmatprep.subr.bf16.mxu0 0
    %1251 = vmatpush1.bf16.msra.mxu0 0
    %1252 = vmatprep.subr.bf16.mxu0 0
    %1253 = vmatpush1.bf16.msra.mxu0 0
    %1254 = vmatprep.subr.bf16.mxu0 0
    %1255 = vmatpush1.bf16.msra.mxu0 0
    %1256 = vmatprep.subr.bf16.mxu0 0
    %1257 = vmatpush1.bf16.msra.mxu0 0
    %1258 = vmatprep.subr.bf16.mxu0 0
    %1259 = vmatpush1.bf16.msra.mxu0 0
    %1260 = vmatprep.subr.bf16.mxu0 0
    %1261 = vmatpush1.bf16.msra.mxu0 0
    %1262 = vmatprep.subr.bf16.mxu0 0
    %1263 = vmatpush1.bf16.msra.mxu0 0
    %1264 = vmatprep.subr.bf16.mxu0 0
    %1265 = vmatpush1.bf16.msra.mxu0 0
    %1266 = vmatprep.subr.bf16.mxu0 0
    %1267 = vmatpush1.bf16.msra.mxu0 0
    %1268 = vmatprep.subr.bf16.mxu0 0
    %1269 = vmatpush1.bf16.msra.mxu0 0
    %1270 = vmatprep.mubr.bf16.mxu0 0
    %1271 = vmatmul.mubr.bf16.gmra.mrb[0].mxu0 %v1236
    %v1272 = vpop.f32.mrb[0].mxu0
    %v1273 = vadd.f32 0.0, %v1272
    %v1274 = vpop.f32.mrb[0].mxu0
    %v1275 = vpop.f32.mrb[0].mxu0
    %v1276 = vadd.f32 0.0, %v1275
    %v1277 = vpop.f32.mrb[0].mxu0
    %1278 = vdwg.mxu0
    %v1279 = vld [vmem:[%s4 + $0x14] sm:$0xf]
    %v1280 = vpack.c.bf16 %v1276, %v1273
    %v1282 = vunpack.c.l.b16 %v1279
    %v1283 = vpack.c.b16 %v1282, %v1282
    %1284 = vrot.lane.b32.xlu0 %v1283, 32
    %v1285 = vpop.permute.xlu0 %1284
    %v1287 = vsel %vm161, %v1280, 0
    %v1290 = vsel %vm413, %v1285, 0
    %1292 = vmatprep.subr.bf16.mxu0 0
    %1293 = vmatpush1.bf16.msra.mxu0 %v1290
    %1294 = vmatprep.subr.bf16.mxu0 0
    %1295 = vmatpush1.bf16.msra.mxu0 0
    %1296 = vmatprep.subr.bf16.mxu0 0
    %1297 = vmatpush1.bf16.msra.mxu0 0
    %1298 = vmatprep.subr.bf16.mxu0 0
    %1299 = vmatpush1.bf16.msra.mxu0 0
    %1300 = vmatprep.subr.bf16.mxu0 0
    %1301 = vmatpush1.bf16.msra.mxu0 0
    %1302 = vmatprep.subr.bf16.mxu0 0
    %1303 = vmatpush1.bf16.msra.mxu0 0
    %1304 = vmatprep.subr.bf16.mxu0 0
    %1305 = vmatpush1.bf16.msra.mxu0 0
    %1306 = vmatprep.subr.bf16.mxu0 0
    %1307 = vmatpush1.bf16.msra.mxu0 0
    %1308 = vmatprep.subr.bf16.mxu0 0
    %1309 = vmatpush1.bf16.msra.mxu0 0
    %1310 = vmatprep.subr.bf16.mxu0 0
    %1311 = vmatpush1.bf16.msra.mxu0 0
    %1312 = vmatprep.subr.bf16.mxu0 0
    %1313 = vmatpush1.bf16.msra.mxu0 0
    %1314 = vmatprep.subr.bf16.mxu0 0
    %1315 = vmatpush1.bf16.msra.mxu0 0
    %1316 = vmatprep.subr.bf16.mxu0 0
    %1317 = vmatpush1.bf16.msra.mxu0 0
    %1318 = vmatprep.subr.bf16.mxu0 0
    %1319 = vmatpush1.bf16.msra.mxu0 0
    %1320 = vmatprep.subr.bf16.mxu0 0
    %1321 = vmatpush1.bf16.msra.mxu0 0
    %1322 = vmatprep.subr.bf16.mxu0 0
    %1323 = vmatpush1.bf16.msra.mxu0 0
    %1324 = vmatprep.mubr.bf16.mxu0 0
    %1325 = vmatmul.mubr.bf16.gmra.mrb[0].mxu0 %v1287
    %v1326 = vpop.f32.mrb[0].mxu0
    %v1327 = vadd.f32 0.0, %v1326
    %v1328 = vpop.f32.mrb[0].mxu0
    %v1329 = vpop.f32.mrb[0].mxu0
    %v1330 = vadd.f32 0.0, %v1329
    %v1331 = vpop.f32.mrb[0].mxu0
    %1332 = vdwg.mxu0
    %v1334 = vunpack.c.l.b16 %v1155
    %v1335 = vpack.c.b16 %v1334, %v1334
    %1336 = vrot.lane.b32.xlu0 %v1335, 32
    %v1337 = vpop.permute.xlu0 %1336
    %v1339 = vsel %vm161, %v1156, 0
    %v1342 = vsel %vm413, %v1337, 0
    %1344 = vmatprep.subr.bf16.mxu0 0
    %1345 = vmatpush1.bf16.msra.mxu0 %v1342
    %1346 = vmatprep.subr.bf16.mxu0 0
    %1347 = vmatpush1.bf16.msra.mxu0 0
    %1348 = vmatprep.subr.bf16.mxu0 0
    %1349 = vmatpush1.bf16.msra.mxu0 0
    %1350 = vmatprep.subr.bf16.mxu0 0
    %1351 = vmatpush1.bf16.msra.mxu0 0
    %1352 = vmatprep.subr.bf16.mxu0 0
    %1353 = vmatpush1.bf16.msra.mxu0 0
    %1354 = vmatprep.subr.bf16.mxu0 0
    %1355 = vmatpush1.bf16.msra.mxu0 0
    %1356 = vmatprep.subr.bf16.mxu0 0
    %1357 = vmatpush1.bf16.msra.mxu0 0
    %1358 = vmatprep.subr.bf16.mxu0 0
    %1359 = vmatpush1.bf16.msra.mxu0 0
    %1360 = vmatprep.subr.bf16.mxu0 0
    %1361 = vmatpush1.bf16.msra.mxu0 0
    %1362 = vmatprep.subr.bf16.mxu0 0
    %1363 = vmatpush1.bf16.msra.mxu0 0
    %1364 = vmatprep.subr.bf16.mxu0 0
    %1365 = vmatpush1.bf16.msra.mxu0 0
    %1366 = vmatprep.subr.bf16.mxu0 0
    %1367 = vmatpush1.bf16.msra.mxu0 0
    %1368 = vmatprep.subr.bf16.mxu0 0
    %1369 = vmatpush1.bf16.msra.mxu0 0
    %1370 = vmatprep.subr.bf16.mxu0 0
    %1371 = vmatpush1.bf16.msra.mxu0 0
    %1372 = vmatprep.subr.bf16.mxu0 0
    %1373 = vmatpush1.bf16.msra.mxu0 0
    %1374 = vmatprep.subr.bf16.mxu0 0
    %1375 = vmatpush1.bf16.msra.mxu0 0
    %1376 = vmatprep.mubr.bf16.mxu0 0
    %1377 = vmatmul.mubr.bf16.gmra.mrb[0].mxu0 %v1339
    %v1378 = vpop.f32.mrb[0].mxu0
    %v1379 = vadd.f32 %v1327, %v1378
    %v1380 = vpop.f32.mrb[0].mxu0
    %v1381 = vpop.f32.mrb[0].mxu0
    %v1382 = vadd.f32 %v1330, %v1381
    %v1383 = vpop.f32.mrb[0].mxu0
    %1384 = vdwg.mxu0
    %1385 = vrot.lane.b32.xlu0 %v988, 112
    %v1386 = vpop.permute.xlu0 %1385
    %1387 = vrot.lane.b32.xlu0 %v1033, 80
    %v1388 = vpop.permute.xlu0 %1387
    %v1390 = vsel %vm161, %v1386, 0
    %v1393 = vsel %vm161, %v1388, 0
    %1395 = vmatprep.subr.bf16.mxu0 0
    %1396 = vmatpush1.bf16.xpose.msra.mxu0 %v1393
    %1397 = vmatprep.subr.bf16.mxu0 0
    %1398 = vmatpush1.bf16.xpose.msra.mxu0 0
    %1399 = vmatprep.subr.bf16.mxu0 0
    %1400 = vmatpush1.bf16.xpose.msra.mxu0 0
    %1401 = vmatprep.subr.bf16.mxu0 0
    %1402 = vmatpush1.bf16.xpose.msra.mxu0 0
    %1403 = vmatprep.subr.bf16.mxu0 0
    %1404 = vmatpush1.bf16.xpose.msra.mxu0 0
    %1405 = vmatprep.subr.bf16.mxu0 0
    %1406 = vmatpush1.bf16.xpose.msra.mxu0 0
    %1407 = vmatprep.subr.bf16.mxu0 0
    %1408 = vmatpush1.bf16.xpose.msra.mxu0 0
    %1409 = vmatprep.subr.bf16.mxu0 0
    %1410 = vmatpush1.bf16.xpose.msra.mxu0 0
    %1411 = vmatprep.subr.bf16.mxu0 0
    %1412 = vmatpush1.bf16.xpose.msra.mxu0 0
    %1413 = vmatprep.subr.bf16.mxu0 0
    %1414 = vmatpush1.bf16.xpose.msra.mxu0 0
    %1415 = vmatprep.subr.bf16.mxu0 0
    %1416 = vmatpush1.bf16.xpose.msra.mxu0 0
    %1417 = vmatprep.subr.bf16.mxu0 0
    %1418 = vmatpush1.bf16.xpose.msra.mxu0 0
    %1419 = vmatprep.subr.bf16.mxu0 0
    %1420 = vmatpush1.bf16.xpose.msra.mxu0 0
    %1421 = vmatprep.subr.bf16.mxu0 0
    %1422 = vmatpush1.bf16.xpose.msra.mxu0 0
    %1423 = vmatprep.subr.bf16.mxu0 0
    %1424 = vmatpush1.bf16.xpose.msra.mxu0 0
    %1425 = vmatprep.subr.bf16.mxu0 0
    %1426 = vmatpush1.bf16.xpose.msra.mxu0 0
    %1427 = vmatprep.mubr.bf16.mxu0 0
    %1428 = vmatmul.mubr.bf16.gmra.mrb[0].mxu0 %v1390
    %v1429 = vpop.f32.mrb[0].mxu0
    %v1430 = vadd.f32 %v32, %v1429
    %v1431 = vpop.f32.mrb[0].mxu0
    %v1432 = vpop.f32.mrb[0].mxu0
    %v1433 = vadd.f32 %v33, %v1432
    %v1434 = vpop.f32.mrb[0].mxu0
    %1435 = vdwg.mxu0
    %v1436 = vsel %vm209, %v1430, -inf
    %1437 = vmax.xlane.f32.xlu0 %v1436
    %v1438 = vpop.xlane.xlu0 %1437
    %v1439 = vsel %vm209, %v1433, -inf
    %1440 = vmax.xlane.f32.xlu0 %v1439
    %v1441 = vpop.xlane.xlu0 %1440
    %v1442 = vsub.f32 %v1430, %v1438
    %v1443 = vsub.f32 %v1433, %v1441
    %v1444 = vmul.f32 %v1442, 1.442695
    %v1445 = vpow.pop %v1444
    %v1446 = vmul.f32 %v1443, 1.442695
    %v1447 = vpow.pop %v1446
    %v1448 = vsel %vm209, %v1445, 0.0
    %1449 = vadd.xlane.f32.xlu0 %v1448
    %v1450 = vpop.xlane.xlu0 %1449
    %v1451 = vsel %vm209, %v1447, 0.0
    %1452 = vadd.xlane.f32.xlu0 %v1451
    %v1453 = vpop.xlane.xlu0 %1452
    %v1454 = vrcp.pop %v1450
    %v1455 = vrcp.pop %v1453
    %v1456 = vmul.f32 %v1445, %v1454
    %v1457 = vmul.f32 %v1447, %v1455
    %v1458 = vpack.c.bf16 %v1457, %v1456
    %1459 = vrot.lane.b32.xlu0 %v1033, 48
    %v1460 = vpop.permute.xlu0 %1459
    %v1463 = vsel %vm209, %v1458, 0
    %1465 = vmatprep.subr.bf16.mxu0 0
    %1466 = vmatpush1.bf16.msra.mxu0 %v1460
    %1467 = vmatprep.subr.bf16.mxu0 0
    %1468 = vmatpush1.bf16.msra.mxu0 0
    %1469 = vmatprep.subr.bf16.mxu0 0
    %1470 = vmatpush1.bf16.msra.mxu0 0
    %1471 = vmatprep.subr.bf16.mxu0 0
    %1472 = vmatpush1.bf16.msra.mxu0 0
    %1473 = vmatprep.subr.bf16.mxu0 0
    %1474 = vmatpush1.bf16.msra.mxu0 0
    %1475 = vmatprep.subr.bf16.mxu0 0
    %1476 = vmatpush1.bf16.msra.mxu0 0
    %1477 = vmatprep.subr.bf16.mxu0 0
    %1478 = vmatpush1.bf16.msra.mxu0 0
    %1479 = vmatprep.subr.bf16.mxu0 0
    %1480 = vmatpush1.bf16.msra.mxu0 0
    %1481 = vmatprep.subr.bf16.mxu0 0
    %1482 = vmatpush1.bf16.msra.mxu0 0
    %1483 = vmatprep.subr.bf16.mxu0 0
    %1484 = vmatpush1.bf16.msra.mxu0 0
    %1485 = vmatprep.subr.bf16.mxu0 0
    %1486 = vmatpush1.bf16.msra.mxu0 0
    %1487 = vmatprep.subr.bf16.mxu0 0
    %1488 = vmatpush1.bf16.msra.mxu0 0
    %1489 = vmatprep.subr.bf16.mxu0 0
    %1490 = vmatpush1.bf16.msra.mxu0 0
    %1491 = vmatprep.subr.bf16.mxu0 0
    %1492 = vmatpush1.bf16.msra.mxu0 0
    %1493 = vmatprep.subr.bf16.mxu0 0
    %1494 = vmatpush1.bf16.msra.mxu0 0
    %1495 = vmatprep.subr.bf16.mxu0 0
    %1496 = vmatpush1.bf16.msra.mxu0 0
    %1497 = vmatprep.mubr.bf16.mxu0 0
    %1498 = vmatmul.mubr.bf16.gmra.mrb[0].mxu0 %v1463
    %v1499 = vpop.f32.mrb[0].mxu0
    %v1500 = vadd.f32 0.0, %v1499
    %v1501 = vpop.f32.mrb[0].mxu0
    %v1502 = vpop.f32.mrb[0].mxu0
    %v1503 = vadd.f32 0.0, %v1502
    %v1504 = vpop.f32.mrb[0].mxu0
    %1505 = vdwg.mxu0
    %v1506 = vld [vmem:[%s4 + $0x18] sm:$0xf]
    %v1507 = vpack.c.bf16 %v1503, %v1500
    %v1509 = vunpack.c.l.b16 %v1506
    %v1510 = vpack.c.b16 %v1509, %v1509
    %1511 = vrot.lane.b32.xlu0 %v1510, 32
    %v1512 = vpop.permute.xlu0 %1511
    %v1514 = vsel %vm161, %v1507, 0
    %v1517 = vsel %vm413, %v1512, 0
    %1519 = vmatprep.subr.bf16.mxu0 0
    %1520 = vmatpush1.bf16.msra.mxu0 %v1517
    %1521 = vmatprep.subr.bf16.mxu0 0
    %1522 = vmatpush1.bf16.msra.mxu0 0
    %1523 = vmatprep.subr.bf16.mxu0 0
    %1524 = vmatpush1.bf16.msra.mxu0 0
    %1525 = vmatprep.subr.bf16.mxu0 0
    %1526 = vmatpush1.bf16.msra.mxu0 0
    %1527 = vmatprep.subr.bf16.mxu0 0
    %1528 = vmatpush1.bf16.msra.mxu0 0
    %1529 = vmatprep.subr.bf16.mxu0 0
    %1530 = vmatpush1.bf16.msra.mxu0 0
    %1531 = vmatprep.subr.bf16.mxu0 0
    %1532 = vmatpush1.bf16.msra.mxu0 0
    %1533 = vmatprep.subr.bf16.mxu0 0
    %1534 = vmatpush1.bf16.msra.mxu0 0
    %1535 = vmatprep.subr.bf16.mxu0 0
    %1536 = vmatpush1.bf16.msra.mxu0 0
    %1537 = vmatprep.subr.bf16.mxu0 0
    %1538 = vmatpush1.bf16.msra.mxu0 0
    %1539 = vmatprep.subr.bf16.mxu0 0
    %1540 = vmatpush1.bf16.msra.mxu0 0
    %1541 = vmatprep.subr.bf16.mxu0 0
    %1542 = vmatpush1.bf16.msra.mxu0 0
    %1543 = vmatprep.subr.bf16.mxu0 0
    %1544 = vmatpush1.bf16.msra.mxu0 0
    %1545 = vmatprep.subr.bf16.mxu0 0
    %1546 = vmatpush1.bf16.msra.mxu0 0
    %1547 = vmatprep.subr.bf16.mxu0 0
    %1548 = vmatpush1.bf16.msra.mxu0 0
    %1549 = vmatprep.subr.bf16.mxu0 0
    %1550 = vmatpush1.bf16.msra.mxu0 0
    %1551 = vmatprep.mubr.bf16.mxu0 0
    %1552 = vmatmul.mubr.bf16.gmra.mrb[0].mxu0 %v1514
    %v1553 = vpop.f32.mrb[0].mxu0
    %v1554 = vadd.f32 0.0, %v1553
    %v1555 = vpop.f32.mrb[0].mxu0
    %v1556 = vpop.f32.mrb[0].mxu0
    %v1557 = vadd.f32 0.0, %v1556
    %v1558 = vpop.f32.mrb[0].mxu0
    %1559 = vdwg.mxu0
    %v1560 = vadd.f32 %v1379, %v1554
    %v1561 = vadd.f32 %v1382, %v1557
    %1562 = vrot.lane.b32.xlu0 %v988, 104
    %v1563 = vpop.permute.xlu0 %1562
    %1564 = vrot.lane.b32.xlu0 %v1033, 72
    %v1565 = vpop.permute.xlu0 %1564
    %v1567 = vsel %vm161, %v1563, 0
    %v1570 = vsel %vm161, %v1565, 0
    %1572 = vmatprep.subr.bf16.mxu0 0
    %1573 = vmatpush1.bf16.xpose.msra.mxu0 %v1570
    %1574 = vmatprep.subr.bf16.mxu0 0
    %1575 = vmatpush1.bf16.xpose.msra.mxu0 0
    %1576 = vmatprep.subr.bf16.mxu0 0
    %1577 = vmatpush1.bf16.xpose.msra.mxu0 0
    %1578 = vmatprep.subr.bf16.mxu0 0
    %1579 = vmatpush1.bf16.xpose.msra.mxu0 0
    %1580 = vmatprep.subr.bf16.mxu0 0
    %1581 = vmatpush1.bf16.xpose.msra.mxu0 0
    %1582 = vmatprep.subr.bf16.mxu0 0
    %1583 = vmatpush1.bf16.xpose.msra.mxu0 0
    %1584 = vmatprep.subr.bf16.mxu0 0
    %1585 = vmatpush1.bf16.xpose.msra.mxu0 0
    %1586 = vmatprep.subr.bf16.mxu0 0
    %1587 = vmatpush1.bf16.xpose.msra.mxu0 0
    %1588 = vmatprep.subr.bf16.mxu0 0
    %1589 = vmatpush1.bf16.xpose.msra.mxu0 0
    %1590 = vmatprep.subr.bf16.mxu0 0
    %1591 = vmatpush1.bf16.xpose.msra.mxu0 0
    %1592 = vmatprep.subr.bf16.mxu0 0
    %1593 = vmatpush1.bf16.xpose.msra.mxu0 0
    %1594 = vmatprep.subr.bf16.mxu0 0
    %1595 = vmatpush1.bf16.xpose.msra.mxu0 0
    %1596 = vmatprep.subr.bf16.mxu0 0
    %1597 = vmatpush1.bf16.xpose.msra.mxu0 0
    %1598 = vmatprep.subr.bf16.mxu0 0
    %1599 = vmatpush1.bf16.xpose.msra.mxu0 0
    %1600 = vmatprep.subr.bf16.mxu0 0
    %1601 = vmatpush1.bf16.xpose.msra.mxu0 0
    %1602 = vmatprep.subr.bf16.mxu0 0
    %1603 = vmatpush1.bf16.xpose.msra.mxu0 0
    %1604 = vmatprep.mubr.bf16.mxu0 0
    %1605 = vmatmul.mubr.bf16.gmra.mrb[0].mxu0 %v1567
    %v1606 = vpop.f32.mrb[0].mxu0
    %v1607 = vadd.f32 %v32, %v1606
    %v1608 = vpop.f32.mrb[0].mxu0
    %v1609 = vpop.f32.mrb[0].mxu0
    %v1610 = vadd.f32 %v33, %v1609
    %v1611 = vpop.f32.mrb[0].mxu0
    %1612 = vdwg.mxu0
    %v1613 = vsel %vm209, %v1607, -inf
    %1614 = vmax.xlane.f32.xlu0 %v1613
    %v1615 = vpop.xlane.xlu0 %1614
    %v1616 = vsel %vm209, %v1610, -inf
    %1617 = vmax.xlane.f32.xlu0 %v1616
    %v1618 = vpop.xlane.xlu0 %1617
    %v1619 = vsub.f32 %v1607, %v1615
    %v1620 = vsub.f32 %v1610, %v1618
    %v1621 = vmul.f32 %v1619, 1.442695
    %v1622 = vpow.pop %v1621
    %v1623 = vmul.f32 %v1620, 1.442695
    %v1624 = vpow.pop %v1623
    %v1625 = vsel %vm209, %v1622, 0.0
    %1626 = vadd.xlane.f32.xlu0 %v1625
    %v1627 = vpop.xlane.xlu0 %1626
    %v1628 = vsel %vm209, %v1624, 0.0
    %1629 = vadd.xlane.f32.xlu0 %v1628
    %v1630 = vpop.xlane.xlu0 %1629
    %v1631 = vrcp.pop %v1627
    %v1632 = vrcp.pop %v1630
    %v1633 = vmul.f32 %v1622, %v1631
    %v1634 = vmul.f32 %v1624, %v1632
    %v1635 = vpack.c.bf16 %v1634, %v1633
    %1636 = vrot.lane.b32.xlu0 %v1033, 40
    %v1637 = vpop.permute.xlu0 %1636
    %v1640 = vsel %vm209, %v1635, 0
    %1642 = vmatprep.subr.bf16.mxu0 0
    %1643 = vmatpush1.bf16.msra.mxu0 %v1637
    %1644 = vmatprep.subr.bf16.mxu0 0
    %1645 = vmatpush1.bf16.msra.mxu0 0
    %1646 = vmatprep.subr.bf16.mxu0 0
    %1647 = vmatpush1.bf16.msra.mxu0 0
    %1648 = vmatprep.subr.bf16.mxu0 0
    %1649 = vmatpush1.bf16.msra.mxu0 0
    %1650 = vmatprep.subr.bf16.mxu0 0
    %1651 = vmatpush1.bf16.msra.mxu0 0
    %1652 = vmatprep.subr.bf16.mxu0 0
    %1653 = vmatpush1.bf16.msra.mxu0 0
    %1654 = vmatprep.subr.bf16.mxu0 0
    %1655 = vmatpush1.bf16.msra.mxu0 0
    %1656 = vmatprep.subr.bf16.mxu0 0
    %1657 = vmatpush1.bf16.msra.mxu0 0
    %1658 = vmatprep.subr.bf16.mxu0 0
    %1659 = vmatpush1.bf16.msra.mxu0 0
    %1660 = vmatprep.subr.bf16.mxu0 0
    %1661 = vmatpush1.bf16.msra.mxu0 0
    %1662 = vmatprep.subr.bf16.mxu0 0
    %1663 = vmatpush1.bf16.msra.mxu0 0
    %1664 = vmatprep.subr.bf16.mxu0 0
    %1665 = vmatpush1.bf16.msra.mxu0 0
    %1666 = vmatprep.subr.bf16.mxu0 0
    %1667 = vmatpush1.bf16.msra.mxu0 0
    %1668 = vmatprep.subr.bf16.mxu0 0
    %1669 = vmatpush1.bf16.msra.mxu0 0
    %1670 = vmatprep.subr.bf16.mxu0 0
    %1671 = vmatpush1.bf16.msra.mxu0 0
    %1672 = vmatprep.subr.bf16.mxu0 0
    %1673 = vmatpush1.bf16.msra.mxu0 0
    %1674 = vmatprep.mubr.bf16.mxu0 0
    %1675 = vmatmul.mubr.bf16.gmra.mrb[0].mxu0 %v1640
    %v1676 = vpop.f32.mrb[0].mxu0
    %v1677 = vadd.f32 0.0, %v1676
    %v1678 = vpop.f32.mrb[0].mxu0
    %v1679 = vpop.f32.mrb[0].mxu0
    %v1680 = vadd.f32 0.0, %v1679
    %v1681 = vpop.f32.mrb[0].mxu0
    %1682 = vdwg.mxu0
    %v1683 = vpack.c.bf16 %v1680, %v1677
    %v1684 = vpack.c.b16 %v939, %v939
    %1685 = vrot.lane.b32.xlu0 %v1684, 32
    %v1686 = vpop.permute.xlu0 %1685
    %v1688 = vsel %vm161, %v1683, 0
    %v1691 = vsel %vm413, %v1686, 0
    %1693 = vmatprep.subr.bf16.mxu0 0
    %1694 = vmatpush1.bf16.msra.mxu0 %v1691
    %1695 = vmatprep.subr.bf16.mxu0 0
    %1696 = vmatpush1.bf16.msra.mxu0 0
    %1697 = vmatprep.subr.bf16.mxu0 0
    %1698 = vmatpush1.bf16.msra.mxu0 0
    %1699 = vmatprep.subr.bf16.mxu0 0
    %1700 = vmatpush1.bf16.msra.mxu0 0
    %1701 = vmatprep.subr.bf16.mxu0 0
    %1702 = vmatpush1.bf16.msra.mxu0 0
    %1703 = vmatprep.subr.bf16.mxu0 0
    %1704 = vmatpush1.bf16.msra.mxu0 0
    %1705 = vmatprep.subr.bf16.mxu0 0
    %1706 = vmatpush1.bf16.msra.mxu0 0
    %1707 = vmatprep.subr.bf16.mxu0 0
    %1708 = vmatpush1.bf16.msra.mxu0 0
    %1709 = vmatprep.subr.bf16.mxu0 0
    %1710 = vmatpush1.bf16.msra.mxu0 0
    %1711 = vmatprep.subr.bf16.mxu0 0
    %1712 = vmatpush1.bf16.msra.mxu0 0
    %1713 = vmatprep.subr.bf16.mxu0 0
    %1714 = vmatpush1.bf16.msra.mxu0 0
    %1715 = vmatprep.subr.bf16.mxu0 0
    %1716 = vmatpush1.bf16.msra.mxu0 0
    %1717 = vmatprep.subr.bf16.mxu0 0
    %1718 = vmatpush1.bf16.msra.mxu0 0
    %1719 = vmatprep.subr.bf16.mxu0 0
    %1720 = vmatpush1.bf16.msra.mxu0 0
    %1721 = vmatprep.subr.bf16.mxu0 0
    %1722 = vmatpush1.bf16.msra.mxu0 0
    %1723 = vmatprep.subr.bf16.mxu0 0
    %1724 = vmatpush1.bf16.msra.mxu0 0
    %1725 = vmatprep.mubr.bf16.mxu0 0
    %1726 = vmatmul.mubr.bf16.gmra.mrb[0].mxu0 %v1688
    %v1727 = vpop.f32.mrb[0].mxu0
    %v1728 = vadd.f32 0.0, %v1727
    %v1729 = vpop.f32.mrb[0].mxu0
    %v1730 = vpop.f32.mrb[0].mxu0
    %v1731 = vadd.f32 0.0, %v1730
    %v1732 = vpop.f32.mrb[0].mxu0
    %1733 = vdwg.mxu0
    %v1734 = vadd.f32 %v1560, %v1728
    %v1735 = vadd.f32 %v1561, %v1731
    %v1736 = vlaneseq
    %v1737 = vshrl.u32 %v1736, 7
    %v1738 = vsub.s32 0, %v1737
    %v1739 = vrot.slane %v1034, %v1738
    %v1740 = vadd.f32 %v1734, %v1739
    %v1741 = vadd.f32 %v1735, %v1739
    %v1742 = vadd.f32 %v867, %v1740
    %v1743 = vadd.f32 %v868, %v1741
    %v1744 = vld [vmem:[%s5 + $0xa] sm:$0x1]
    %v1745 = vld [vmem:[%s5 + $0xb] sm:$0x1]
    %v1746 = vsel %vm36, %v1742, 0.0
    %1747 = vadd.xlane.f32.xlu0 %v1746
    %v1748 = vpop.xlane.xlu0 %1747
    %v1749 = vsel %vm36, %v1743, 0.0
    %1750 = vadd.xlane.f32.xlu0 %v1749
    %v1751 = vpop.xlane.xlu0 %1750
    %v1752 = vmul.f32 %v1748, %v43
    %v1753 = vmul.f32 %v1751, %v43
    %v1754 = vsub.f32 %v1742, %v1752
    %v1755 = vsub.f32 %v1743, %v1753
    %v1756 = vmul.f32 %v1754, %v1754
    %v1757 = vmul.f32 %v1755, %v1755
    %v1758 = vsel %vm36, %v1756, 0.0
    %1759 = vadd.xlane.f32.xlu0 %v1758
    %v1760 = vpop.xlane.xlu0 %1759
    %v1761 = vsel %vm36, %v1757, 0.0
    %1762 = vadd.xlane.f32.xlu0 %v1761
    %v1763 = vpop.xlane.xlu0 %1762
    %v1764 = vmul.f32 %v1760, %v56
    %v1765 = vmul.f32 %v1763, %v56
    %v1766 = vlaneseq
    %v1767 = vshrl.u32 %v1766, 7
    %v1768 = vsub.s32 0, %v1767
    %v1769 = vrot.slane %v1744, %v1768
    %v1770 = vmul.f32 %v1769, %v1754
    %v1771 = vmul.f32 %v1769, %v1755
    %v1772 = vlaneseq
    %v1773 = vshrl.u32 %v1772, 7
    %v1774 = vsub.s32 0, %v1773
    %v1775 = vrot.slane %v1745, %v1774
    %v1776 = vrcp.pop %v1775
    %v1777 = vmul.f32 %v1770, %v1776
    %v1778 = vmul.f32 %v1771, %v1776
    %v1779 = vrsqrt.pop %v1764
    %v1780 = vmul.f32 %v1764, %v1779
    %vm1781 = vcmp.eq.f32.partialorder %v1764, inf
    %v1782 = vsel %vm1781, %v1764, %v1780
    %vm1783 = vcmp.eq.f32.partialorder %v1764, 0.0
    %v1784 = vand.u32 %v1764, 2147483648
    %v1785 = vsel %vm1783, %v1784, %v1782
    %v1786 = vrsqrt.pop %v1765
    %v1787 = vmul.f32 %v1765, %v1786
    %vm1788 = vcmp.eq.f32.partialorder %v1765, inf
    %v1789 = vsel %vm1788, %v1765, %v1787
    %vm1790 = vcmp.eq.f32.partialorder %v1765, 0.0
    %v1791 = vand.u32 %v1765, 2147483648
    %v1792 = vsel %vm1790, %v1791, %v1789
    %v1793 = vadd.f32 %v1777, %v1785
    %v1794 = vadd.f32 %v1778, %v1792
    %v1795 = vadd.f32 %v1793, 1e-06
    %v1796 = vadd.f32 %v1794, 1e-06
    %v1797 = vpack.c.bf16 %v1796, %v1795
    %v1798 = vld [vmem:[%s4 + $0x20] sm:$0xf]
    %v1799 = vld [vmem:[%s4 + $0x24] sm:$0xf]
    %v1800 = vld [vmem:[%s4 + $0x28] sm:$0xf]
    %v1801 = vld [vmem:[%s4 + $0x2c] sm:$0xf]
    %v1802 = vld [vmem:[%s5 + $0x4] sm:$0x1]
    %v1803 = vlaneseq
    %v1804 = vshrl.u32 %v1803, 7
    %v1805 = vsub.s32 0, %v1804
    %v1806 = vrot.slane %v1802, %v1805
    %v1811 = vunpack.c.l.b16 %v1798
    %v1812 = vunpack.c.l.b16 %v1799
    %v1813 = vunpack.c.l.b16 %v1800
    %v1814 = vunpack.c.l.b16 %v1801
    %v1815 = vpack.c.b16 %v1812, %v1811
    %v1816 = vpack.c.b16 %v1814, %v1813
    %v1820 = vsel %vm36, %v1797, 0
    %1822 = vmatprep.subr.bf16.mxu0 0
    %1823 = vmatpush1.bf16.msra.mxu0 %v1815
    %1824 = vmatprep.subr.bf16.mxu0 0
    %1825 = vmatpush1.bf16.msra.mxu0 %v1816
    %1826 = vmatprep.subr.bf16.mxu0 0
    %1827 = vmatpush1.bf16.msra.mxu0 0
    %1828 = vmatprep.subr.bf16.mxu0 0
    %1829 = vmatpush1.bf16.msra.mxu0 0
    %1830 = vmatprep.subr.bf16.mxu0 0
    %1831 = vmatpush1.bf16.msra.mxu0 0
    %1832 = vmatprep.subr.bf16.mxu0 0
    %1833 = vmatpush1.bf16.msra.mxu0 0
    %1834 = vmatprep.subr.bf16.mxu0 0
    %1835 = vmatpush1.bf16.msra.mxu0 0
    %1836 = vmatprep.subr.bf16.mxu0 0
    %1837 = vmatpush1.bf16.msra.mxu0 0
    %1838 = vmatprep.subr.bf16.mxu0 0
    %1839 = vmatpush1.bf16.msra.mxu0 0
    %1840 = vmatprep.subr.bf16.mxu0 0
    %1841 = vmatpush1.bf16.msra.mxu0 0
    %1842 = vmatprep.subr.bf16.mxu0 0
    %1843 = vmatpush1.bf16.msra.mxu0 0
    %1844 = vmatprep.subr.bf16.mxu0 0
    %1845 = vmatpush1.bf16.msra.mxu0 0
    %1846 = vmatprep.subr.bf16.mxu0 0
    %1847 = vmatpush1.bf16.msra.mxu0 0
    %1848 = vmatprep.subr.bf16.mxu0 0
    %1849 = vmatpush1.bf16.msra.mxu0 0
    %1850 = vmatprep.subr.bf16.mxu0 0
    %1851 = vmatpush1.bf16.msra.mxu0 0
    %1852 = vmatprep.subr.bf16.mxu0 0
    %1853 = vmatpush1.bf16.msra.mxu0 0
    %1854 = vmatprep.mubr.bf16.mxu0 0
    %1855 = vmatmul.mubr.bf16.gmra.mrb[0].mxu0 %v1820
    %v1856 = vpop.f32.mrb[0].mxu0
    %v1857 = vadd.f32 %v1806, %v1856
    %v1858 = vpop.f32.mrb[0].mxu0
    %v1859 = vpop.f32.mrb[0].mxu0
    %v1860 = vadd.f32 %v1806, %v1859
    %v1861 = vpop.f32.mrb[0].mxu0
    %1862 = vdwg.mxu0
    %v1863 = vpack.c.bf16 %v1860, %v1857
    %v1864 = vld [vmem:[%s4 + $0x30] sm:$0xf]
    %v1865 = vld [vmem:[%s4 + $0x34] sm:$0xf]
    %v1866 = vld [vmem:[%s4 + $0x38] sm:$0xf]
    %v1867 = vld [vmem:[%s4 + $0x3c] sm:$0xf]
    %v1868 = vld [vmem:[%s4 + $0x40] sm:$0xf]
    %v1869 = vld [vmem:[%s4 + $0x44] sm:$0xf]
    %v1870 = vld [vmem:[%s4 + $0x48] sm:$0xf]
    %v1871 = vld [vmem:[%s4 + $0x4c] sm:$0xf]
    %v1872 = vld [vmem:[%s5 + $0x5] sm:$0x1]
    %v1873 = vlaneseq
    %v1874 = vshrl.u32 %v1873, 7
    %v1875 = vsub.s32 0, %v1874
    %v1876 = vrot.slane %v1872, %v1875
    %v1885 = vunpack.c.l.b16 %v1864
    %v1886 = vunpack.c.l.b16 %v1865
    %v1887 = vunpack.c.l.b16 %v1866
    %v1888 = vunpack.c.l.b16 %v1867
    %v1889 = vunpack.c.l.b16 %v1868
    %v1890 = vunpack.c.l.b16 %v1869
    %v1891 = vunpack.c.l.b16 %v1870
    %v1892 = vunpack.c.l.b16 %v1871
    %v1893 = vpack.c.b16 %v1886, %v1885
    %v1894 = vpack.c.b16 %v1888, %v1887
    %v1895 = vpack.c.b16 %v1890, %v1889
    %v1896 = vpack.c.b16 %v1892, %v1891
    %vm1901 = vcmask 523264
    %v1903 = vsel %vm1901, %v1863, 0
    %1905 = vmatprep.subr.bf16.mxu0 0
    %1906 = vmatpush1.bf16.msra.mxu0 %v1893
    %1907 = vmatprep.subr.bf16.mxu0 0
    %1908 = vmatpush1.bf16.msra.mxu0 %v1894
    %1909 = vmatprep.subr.bf16.mxu0 0
    %1910 = vmatpush1.bf16.msra.mxu0 %v1895
    %1911 = vmatprep.subr.bf16.mxu0 0
    %1912 = vmatpush1.bf16.msra.mxu0 %v1896
    %1913 = vmatprep.subr.bf16.mxu0 0
    %1914 = vmatpush1.bf16.msra.mxu0 0
    %1915 = vmatprep.subr.bf16.mxu0 0
    %1916 = vmatpush1.bf16.msra.mxu0 0
    %1917 = vmatprep.subr.bf16.mxu0 0
    %1918 = vmatpush1.bf16.msra.mxu0 0
    %1919 = vmatprep.subr.bf16.mxu0 0
    %1920 = vmatpush1.bf16.msra.mxu0 0
    %1921 = vmatprep.subr.bf16.mxu0 0
    %1922 = vmatpush1.bf16.msra.mxu0 0
    %1923 = vmatprep.subr.bf16.mxu0 0
    %1924 = vmatpush1.bf16.msra.mxu0 0
    %1925 = vmatprep.subr.bf16.mxu0 0
    %1926 = vmatpush1.bf16.msra.mxu0 0
    %1927 = vmatprep.subr.bf16.mxu0 0
    %1928 = vmatpush1.bf16.msra.mxu0 0
    %1929 = vmatprep.subr.bf16.mxu0 0
    %1930 = vmatpush1.bf16.msra.mxu0 0
    %1931 = vmatprep.subr.bf16.mxu0 0
    %1932 = vmatpush1.bf16.msra.mxu0 0
    %1933 = vmatprep.subr.bf16.mxu0 0
    %1934 = vmatpush1.bf16.msra.mxu0 0
    %1935 = vmatprep.subr.bf16.mxu0 0
    %1936 = vmatpush1.bf16.msra.mxu0 0
    %1937 = vmatprep.mubr.bf16.mxu0 0
    %1938 = vmatmul.mubr.bf16.gmra.mrb[0].mxu0 %v1903
    %v1939 = vpop.f32.mrb[0].mxu0
    %v1940 = vadd.f32 %v1876, %v1939
    %v1941 = vpop.f32.mrb[0].mxu0
    %v1942 = vpop.f32.mrb[0].mxu0
    %v1943 = vadd.f32 %v1876, %v1942
    %v1944 = vpop.f32.mrb[0].mxu0
    %1945 = vdwg.mxu0
    %v1946 = vadd.f32 %v1742, %v1940
    %v1947 = vadd.f32 %v1743, %v1943
    %1948 = vst.msk [vmem:[#allocation2] sm:$0xff] %vm36, %v1946
    %1949 = vst.msk [vmem:[#allocation2 + $0x8] sm:$0xff] %vm36, %v1947
    // Predicated region
    $region26: #{decoder_block.1} parent=1 // pred_check
      _
    $region27: #{decoder_block.1} parent=1 // pred_check_branch
      %1951 = sbr.rel (0) target = $region29
    $region28: #{decoder_block.1} parent=1 // pred_region
      %s1953 = ssub.s32 256, 256
      %1954 = vsyncadd [#allocation3], %s1953
      %s1955 = sshll.u32 [#allocation2], 4
      %s1956 = int_to_ptr.vmem [resolvable:$true] %s1955
      %1961 = dma.vmem_to_hbm [thread:$0]  %s1956, 256, %s6, [#allocation3], 128, 128, 8
    $region29: #{decoder_block.1} parent=1 // pred_fallthru
      _
    // Predicated region
    $region30: #{decoder_block.1} parent=1 // pred_check
      _
    $region31: #{decoder_block.1} parent=1 // pred_check_branch
      %1963 = sbr.rel (0) target = $region33
    $region32: #{decoder_block.1} parent=1 // pred_region
      %1964 = dma.done [#allocation3], 256
    $region33: #{decoder_block.1} parent=1 // pred_fallthru
      _
    %1965 = vsyncpa [#allocation3], 1

</llo_original>
